<compile_context>
chip_gen: v7x
topology: tpu7x:2x2x1
jax: 0.10.0
libtpu: 0.0.40
codegen_flags: <defaults>
</compile_context>

<pallas_src>
import functools

import jax
import jax.numpy as jnp
from jax import lax
from jax.experimental import pallas as pl
from jax.experimental.pallas import tpu as pltpu


# ---------------------------------------------------------------------------
# Kernel
# ---------------------------------------------------------------------------
def attention_kernel(k_ref, v_ref, q_ref,
                     wT_ref, wb_ref,
                     wcc_ref, wcq_ref, wcb_ref,
                     h_ref, e_ref, *, Lk, approx_recip):
    block_b, Lq, H = q_ref.shape
    Lk_blk = k_ref.shape[1]           # == Lk (unpadded) or Lk rounded up to 128

    q = q_ref[...]                    # (block_b, Lq, H)   compute dtype
    k = k_ref[...]                    # (block_b, Lk_blk, H)
    v = v_ref[...]                    # (block_b, Lk_blk, H)

    # Q-side projection amortized over all rows of the block: one MXU pass on
    # (block_b*Lq, H) instead of block_b small matmuls.  Bias kept in f32.
    q2 = q.reshape(block_b * Lq, H)
    wq2 = jnp.dot(q2, wT_ref[...], preferred_element_type=jnp.float32) + wb_ref[...]
    wq = wq2.astype(k.dtype).reshape(block_b, Lq, H)

    # score (method='general'): contraction over H of K (no in-kernel transpose).
    s = jnp.einsum('bqh,bkh->bqk', wq, k,
                   preferred_element_type=jnp.float32)          # (block_b, Lq, Lk_blk)

    # Mask padded key positions (only present when the lane-dense-e path is taken).
    if Lk_blk > Lk:
        col = lax.broadcasted_iota(jnp.int32, (1, 1, Lk_blk), 2)
        s = jnp.where(col < Lk, s, -1e30)

    # softmax over keys; normalization via EUP reciprocal on the fast path.
    m = jnp.max(s, axis=-1, keepdims=True)
    p = jnp.exp(s - m)
    denom = jnp.sum(p, axis=-1, keepdims=True)
    e = p * pl.reciprocal(denom, approx=approx_recip)           # f32

    # context
    c = jnp.einsum('bqk,bkh->bqh', e.astype(v.dtype), v,
                   preferred_element_type=jnp.float32)          # (block_b, Lq, H) f32

    # output projection: cat(c, Q) @ Wc^T = c @ Wc[:, :H]^T + Q @ Wc[:, H:]^T
    # accumulated in one f32 accumulator, then tanh.
    c2 = c.reshape(block_b * Lq, H).astype(q.dtype)
    h2 = jnp.dot(c2, wcc_ref[...], preferred_element_type=jnp.float32)
    h2 = h2 + jnp.dot(q2, wcq_ref[...], preferred_element_type=jnp.float32)
    h2 = jnp.tanh(h2 + wcb_ref[...])

    h_ref[...] = h2.reshape(block_b, Lq, H).astype(h_ref.dtype)
    e_ref[...] = e.astype(e_ref.dtype)


# ---------------------------------------------------------------------------
# Tiling / VMEM budgeting helpers
# ---------------------------------------------------------------------------
def _round_up(x, m):
    return ((x + m - 1) // m) * m


def _tile_bytes(rows, cols, itemsize):
    """VMEM footprint of a (rows, cols) slab: (8,128) tiles for 32-bit,
    (16,128) for 16-bit (sub-32-bit packs along sublanes).  This captures the
    128/H lane-sparsity inflation when H < 128."""
    sublane = 8 * (4 // itemsize)
    return _round_up(max(rows, 1), sublane) * _round_up(max(cols, 1), 128) * itemsize


def _vmem_capacity_bytes():
    try:
        return int(pltpu.get_tpu_info().vmem_capacity_bytes)
    except Exception:
        return 64 * 1024 * 1024      # conservative: v7x per-TensorCore VMEM


def _pick_block_b(B, Lq, Lk_eff, H, in_itemsize, out_itemsize, vmem_budget_bytes):
    """Largest block_b whose double-buffered tiles + live intermediates fit the
    VMEM budget, while keeping >= 2 grid steps (megacore) and dividing B."""
    per_batch_io = (2 * _tile_bytes(Lk_eff, H, in_itemsize)        # K, V
                    + _tile_bytes(Lq, H, in_itemsize)              # Q
                    + _tile_bytes(Lq, H, out_itemsize)             # h
                    + _tile_bytes(Lq, Lk_eff, out_itemsize))       # e
    # Live f32 intermediates inside the body (s/p/e working set + wq + c).
    per_batch_work = 2 * _tile_bytes(Lq, Lk_eff, 4) + 2 * _tile_bytes(Lq, H, 4)
    per_batch = 2 * per_batch_io + per_batch_work                  # x2: pipeline buffers
    weights = 2 * (3 * _tile_bytes(H, H, in_itemsize) + 2 * _tile_bytes(1, H, 4))

    avail = max(vmem_budget_bytes - weights, per_batch)
    bb = max(1, avail // per_batch)
    if B >= 2:
        bb = min(bb, B // 2)          # keep >= 2 grid steps so both TCs get work
    bb = int(min(bb, B))
    while B % bb:
        bb -= 1
    return bb


# ---------------------------------------------------------------------------
# Wrapper
# ---------------------------------------------------------------------------
def attention_forward(K, V, Q, W, Wb, Wc, Wcb, *,
                      compute_dtype=jnp.bfloat16, out_dtype=None, block_b=None):
    """K, V: (B, Lk, H); Q: (B, Lq, H); W: (H, H); Wb: (H,); Wc: (H, 2H); Wcb: (H,)."""
    B, Lk, H = K.shape
    _, Lq, _ = Q.shape
    if out_dtype is None:
        out_dtype = compute_dtype
    in_itemsize = jnp.dtype(compute_dtype).itemsize
    out_itemsize = jnp.dtype(out_dtype).itemsize

    # --- conditional lane-dense key padding (only when overhead is small) ------
    LANE = 128
    Lk_pad = _round_up(Lk, LANE)
    pad_keys = (Lk_pad != Lk) and ((Lk_pad - Lk) * 4 <= Lk)   # pad fraction <= 25%
    Lk_eff = Lk_pad if pad_keys else Lk

    K_c = K.astype(compute_dtype)
    V_c = V.astype(compute_dtype)
    Q_c = Q.astype(compute_dtype)
    if pad_keys:
        pad = ((0, 0), (0, Lk_pad - Lk), (0, 0))
        K_c = jnp.pad(K_c, pad)
        V_c = jnp.pad(V_c, pad)

    # --- VMEM-budgeted batch blocking ------------------------------------------
    vmem_cap = _vmem_capacity_bytes()
    vmem_limit = int(min(vmem_cap * 3 // 4, 100 * 1024 * 1024))
    vmem_budget = vmem_cap * 2 // 5        # tiles get ~40% of physical; rest headroom
    if block_b is None:
        block_b = _pick_block_b(B, Lq, Lk_eff, H, in_itemsize, out_itemsize, vmem_budget)
    assert B % block_b == 0, "block_b must divide B"
    grid = (B // block_b,)

    # --- weights: pre-transposed so the kernel does plain row-major matmuls -----
    W_T = W.T.astype(compute_dtype)              # (H, H): x @ W^T
    Wc_c_T = Wc[:, :H].T.astype(compute_dtype)   # (H, H): applied to c
    Wc_q_T = Wc[:, H:].T.astype(compute_dtype)   # (H, H): applied to Q
    wb = Wb.reshape(1, H).astype(jnp.float32)    # biases stay f32
    wcb = Wcb.reshape(1, H).astype(jnp.float32)

    kernel = functools.partial(attention_kernel, Lk=Lk,
                               approx_recip=(jnp.dtype(compute_dtype) == jnp.dtype(jnp.bfloat16)))

    batched3 = lambda b: (b, 0, 0)
    shared2 = lambda b: (0, 0)

    out_shape = (
        jax.ShapeDtypeStruct((B, Lq, H), out_dtype),        # h
        jax.ShapeDtypeStruct((B, Lq, Lk_eff), out_dtype),   # e
    )

    h, e = pl.pallas_call(
        kernel,
        out_shape=out_shape,
        grid_spec=pltpu.PrefetchScalarGridSpec(
            num_scalar_prefetch=0,
            grid=grid,
            in_specs=[
                pl.BlockSpec((block_b, Lk_eff, H), batched3),   # K
                pl.BlockSpec((block_b, Lk_eff, H), batched3),   # V
                pl.BlockSpec((block_b, Lq, H), batched3),       # Q
                pl.BlockSpec((H, H), shared2),                  # W^T
                pl.BlockSpec((1, H), shared2),                  # W bias
                pl.BlockSpec((H, H), shared2),                  # Wc[:, :H]^T
                pl.BlockSpec((H, H), shared2),                  # Wc[:, H:]^T
                pl.BlockSpec((1, H), shared2),                  # Wc bias
            ],
            out_specs=[
                pl.BlockSpec((block_b, Lq, H), batched3),       # h
                pl.BlockSpec((block_b, Lq, Lk_eff), batched3),  # e
            ],
        ),
        compiler_params=pltpu.CompilerParams(
            dimension_semantics=("parallel",),
            vmem_limit_bytes=vmem_limit),
    )(K_c, V_c, Q_c, W_T, wb, Wc_c_T, Wc_q_T, wcb)

    if pad_keys:
        e = e[:, :, :Lk]
    return h, e


def attention_reference(K, V, Q, W, Wb, Wc, Wcb):
    """Pure-JAX reference mirroring the PyTorch module (method='general')."""
    with jax.default_matmul_precision("highest"):
        s = jnp.einsum('bqh,bkh->bqk', Q @ W.T + Wb, K)
        e = jax.nn.softmax(s, axis=2)
        c = jnp.einsum('bqk,bkh->bqh', e, V)
        h = jnp.tanh(jnp.concatenate([c, Q], axis=2) @ Wc.T + Wcb)
    return h, e


if __name__ == "__main__":
    # TODO(synk): only method='general' is implemented; the 'dot' / 'concat'
    # score variants of the PyTorch module are alternative configurations not covered.
    B, Lk, Lq, H = 8, 8, 8, 32

    key = jax.random.PRNGKey(0)
    kK, kV, kQ, kW, kWb, kWc, kWcb = jax.random.split(key, 7)

    K = jax.random.normal(kK, (B, Lk, H), dtype=jnp.float32)
    V = jax.random.normal(kV, (B, Lk, H), dtype=jnp.float32)
    Q = jax.random.normal(kQ, (B, Lq, H), dtype=jnp.float32)

    # Deterministic synthetic parameters (init_linear_wt replaced with scaled normals).
    W = 0.1 * jax.random.normal(kW, (H, H), dtype=jnp.float32)        # nn.Linear(H, H)
    Wb = 0.1 * jax.random.normal(kWb, (H,), dtype=jnp.float32)
    Wc = 0.1 * jax.random.normal(kWc, (H, 2 * H), dtype=jnp.float32)  # nn.Linear(2H, H)
    Wcb = 0.1 * jax.random.normal(kWcb, (H,), dtype=jnp.float32)

    h_ref, e_ref = attention_reference(K, V, Q, W, Wb, Wc, Wcb)

    # Exact-ish path (f32 operands, exact reciprocal).
    h32, e32 = attention_forward(K, V, Q, W, Wb, Wc, Wcb,
                                 compute_dtype=jnp.float32, out_dtype=jnp.float32)
    # Fast path (bf16 MXU operands, bf16 outputs, EUP-approx reciprocal).
    hbf, ebf = attention_forward(K, V, Q, W, Wb, Wc, Wcb,
                                 compute_dtype=jnp.bfloat16)
    jax.block_until_ready((h32, e32, hbf, ebf))

    assert h32.shape == (B, Lq, H) and e32.shape == (B, Lq, Lk)
    assert hbf.shape == (B, Lq, H) and ebf.shape == (B, Lq, Lk)

    # Tolerances: the f32 check budgets for possible MXU f32 precision-mode
    # differences between the Pallas kernel and the XLA reference; the bf16
    # check additionally budgets for bf16 operand/output rounding and the
    # approximate EUP reciprocal.
    assert jnp.allclose(h32.astype(jnp.float32), h_ref, atol=2e-2, rtol=2e-2)
    assert jnp.allclose(e32.astype(jnp.float32), e_ref, atol=2e-2, rtol=2e-2)
    assert jnp.allclose(hbf.astype(jnp.float32), h_ref, atol=8e-2, rtol=8e-2)
    assert jnp.allclose(ebf.astype(jnp.float32), e_ref, atol=8e-2, rtol=8e-2)

    print("KERNEL_OK")
</pallas_src>

<mosaic_0001>
module attributes {stable_mosaic.version = 11 : i64} {
  func.func @attention_kernel(%arg0: i32, %arg1: memref<4x8x32xf32, #tpu.memory_space<vmem>>, %arg2: memref<4x8x32xf32, #tpu.memory_space<vmem>>, %arg3: memref<4x8x32xf32, #tpu.memory_space<vmem>>, %arg4: memref<32x32xf32, #tpu.memory_space<vmem>>, %arg5: memref<1x32xf32, #tpu.memory_space<vmem>>, %arg6: memref<32x32xf32, #tpu.memory_space<vmem>>, %arg7: memref<32x32xf32, #tpu.memory_space<vmem>>, %arg8: memref<1x32xf32, #tpu.memory_space<vmem>>, %arg9: memref<4x8x32xf32, #tpu.memory_space<vmem>>, %arg10: memref<4x8x8xf32, #tpu.memory_space<vmem>>) attributes {dimension_semantics = [#tpu.dimension_semantics<parallel>], iteration_bounds = array<i64: 2>, scalar_prefetch = 0 : i64, scratch_operands = 0 : i64, tpu.core_type = #tpu.core_type<tc>, window_params = [{transform_indices = @transform_0, window_bounds = array<i64: 4, 8, 32>}, {transform_indices = @transform_1, window_bounds = array<i64: 4, 8, 32>}, {transform_indices = @transform_2, window_bounds = array<i64: 4, 8, 32>}, {pipeline_mode = #tpu.pipeline_mode<synchronous>, transform_indices = @transform_3, window_bounds = array<i64: 32, 32>}, {pipeline_mode = #tpu.pipeline_mode<synchronous>, transform_indices = @transform_4, window_bounds = array<i64: 1, 32>}, {pipeline_mode = #tpu.pipeline_mode<synchronous>, transform_indices = @transform_5, window_bounds = array<i64: 32, 32>}, {pipeline_mode = #tpu.pipeline_mode<synchronous>, transform_indices = @transform_6, window_bounds = array<i64: 32, 32>}, {pipeline_mode = #tpu.pipeline_mode<synchronous>, transform_indices = @transform_7, window_bounds = array<i64: 1, 32>}, {transform_indices = @transform_8, window_bounds = array<i64: 4, 8, 32>}, {transform_indices = @transform_9, window_bounds = array<i64: 4, 8, 8>}]} {
    %c0 = arith.constant 0 : index
    %c0_0 = arith.constant 0 : index
    %c0_1 = arith.constant 0 : index
    %0 = vector.load %arg3[%c0, %c0_0, %c0_1] : memref<4x8x32xf32, #tpu.memory_space<vmem>>, vector<4x8x32xf32>
    %c0_2 = arith.constant 0 : index
    %c0_3 = arith.constant 0 : index
    %c0_4 = arith.constant 0 : index
    %1 = vector.load %arg1[%c0_2, %c0_3, %c0_4] : memref<4x8x32xf32, #tpu.memory_space<vmem>>, vector<4x8x32xf32>
    %c0_5 = arith.constant 0 : index
    %c0_6 = arith.constant 0 : index
    %c0_7 = arith.constant 0 : index
    %2 = vector.load %arg2[%c0_5, %c0_6, %c0_7] : memref<4x8x32xf32, #tpu.memory_space<vmem>>, vector<4x8x32xf32>
    %3 = vector.shape_cast %0 : vector<4x8x32xf32> to vector<32x32xf32>
    %c0_8 = arith.constant 0 : index
    %c0_9 = arith.constant 0 : index
    %4 = vector.load %arg4[%c0_8, %c0_9] : memref<32x32xf32, #tpu.memory_space<vmem>>, vector<32x32xf32>
    %cst = arith.constant dense<0.000000e+00> : vector<32x32xf32>
    %5 = tpu.matmul %3, %4, %cst {dimension_numbers = #tpu.dot_dimension_numbers<[1], [0], [0], [1], [0, 0, 1, 1], [], []>} : vector<32x32xf32>, vector<32x32xf32>, vector<32x32xf32> -> vector<32x32xf32>
    %c0_10 = arith.constant 0 : index
    %c0_11 = arith.constant 0 : index
    %6 = vector.load %arg5[%c0_10, %c0_11] : memref<1x32xf32, #tpu.memory_space<vmem>>, vector<1x32xf32>
    %7 = vector.broadcast %6 : vector<1x32xf32> to vector<32x32xf32>
    %8 = arith.addf %5, %7 : vector<32x32xf32>
    %9 = vector.shape_cast %8 : vector<32x32xf32> to vector<4x8x32xf32>
    "tpu.trace_start"() <{level = 10 : i32, message = "bqh,bkh->bqk"}> : () -> ()
    %cst_12 = arith.constant dense<0.000000e+00> : vector<4x8x8xf32>
    %10 = tpu.matmul %9, %1, %cst_12 {dimension_numbers = #tpu.dot_dimension_numbers<[2], [2], [1], [1], [0, 0, 0, 1, 1, 1], [0], [0]>} : vector<4x8x32xf32>, vector<4x8x32xf32>, vector<4x8x8xf32> -> vector<4x8x8xf32>
    "tpu.trace_stop"() : () -> ()
    %cst_13 = arith.constant dense<0xFF800000> : vector<4x8xf32>
    %11 = vector.multi_reduction <maximumf>, %10, %cst_13 [2] : vector<4x8x8xf32> to vector<4x8xf32>
    %12 = vector.shape_cast %11 : vector<4x8xf32> to vector<4x8x1xf32>
    %13 = vector.broadcast %12 : vector<4x8x1xf32> to vector<4x8x8xf32>
    %14 = arith.subf %10, %13 : vector<4x8x8xf32>
    %15 = math.exp %14 : vector<4x8x8xf32>
    %cst_14 = arith.constant dense<0.000000e+00> : vector<4x8xf32>
    %16 = vector.multi_reduction <add>, %15, %cst_14 [2] : vector<4x8x8xf32> to vector<4x8xf32>
    %17 = vector.shape_cast %16 : vector<4x8xf32> to vector<4x8x1xf32>
    %18 = tpu.reciprocal %17 : vector<4x8x1xf32> -> vector<4x8x1xf32>
    %19 = vector.broadcast %18 : vector<4x8x1xf32> to vector<4x8x8xf32>
    %20 = arith.mulf %15, %19 : vector<4x8x8xf32>
    "tpu.trace_start"() <{level = 10 : i32, message = "bqk,bkh->bqh"}> : () -> ()
    %cst_15 = arith.constant dense<0.000000e+00> : vector<4x8x32xf32>
    %21 = tpu.matmul %20, %2, %cst_15 {dimension_numbers = #tpu.dot_dimension_numbers<[2], [1], [1], [2], [0, 0, 0, 1, 1, 2], [0], [0]>} : vector<4x8x8xf32>, vector<4x8x32xf32>, vector<4x8x32xf32> -> vector<4x8x32xf32>
    "tpu.trace_stop"() : () -> ()
    %22 = vector.shape_cast %21 : vector<4x8x32xf32> to vector<32x32xf32>
    %c0_16 = arith.constant 0 : index
    %c0_17 = arith.constant 0 : index
    %23 = vector.load %arg6[%c0_16, %c0_17] : memref<32x32xf32, #tpu.memory_space<vmem>>, vector<32x32xf32>
    %cst_18 = arith.constant dense<0.000000e+00> : vector<32x32xf32>
    %24 = tpu.matmul %22, %23, %cst_18 {dimension_numbers = #tpu.dot_dimension_numbers<[1], [0], [0], [1], [0, 0, 1, 1], [], []>} : vector<32x32xf32>, vector<32x32xf32>, vector<32x32xf32> -> vector<32x32xf32>
    %c0_19 = arith.constant 0 : index
    %c0_20 = arith.constant 0 : index
    %25 = vector.load %arg7[%c0_19, %c0_20] : memref<32x32xf32, #tpu.memory_space<vmem>>, vector<32x32xf32>
    %cst_21 = arith.constant dense<0.000000e+00> : vector<32x32xf32>
    %26 = tpu.matmul %3, %25, %cst_21 {dimension_numbers = #tpu.dot_dimension_numbers<[1], [0], [0], [1], [0, 0, 1, 1], [], []>} : vector<32x32xf32>, vector<32x32xf32>, vector<32x32xf32> -> vector<32x32xf32>
    %27 = arith.addf %24, %26 : vector<32x32xf32>
    %c0_22 = arith.constant 0 : index
    %c0_23 = arith.constant 0 : index
    %28 = vector.load %arg8[%c0_22, %c0_23] : memref<1x32xf32, #tpu.memory_space<vmem>>, vector<1x32xf32>
    %29 = vector.broadcast %28 : vector<1x32xf32> to vector<32x32xf32>
    %30 = arith.addf %27, %29 : vector<32x32xf32>
    %31 = math.tanh %30 : vector<32x32xf32>
    %32 = vector.shape_cast %31 : vector<32x32xf32> to vector<4x8x32xf32>
    %c0_24 = arith.constant 0 : index
    %c0_25 = arith.constant 0 : index
    %c0_26 = arith.constant 0 : index
    %33 = vector.load %arg9[%c0_24, %c0_25, %c0_26] : memref<4x8x32xf32, #tpu.memory_space<vmem>>, vector<4x8x32xf32>
    tpu.vector_store %arg9[%c0_24, %c0_25, %c0_26], %32 {strides = array<i32>} : memref<4x8x32xf32, #tpu.memory_space<vmem>>, vector<4x8x32xf32>,
    %c0_27 = arith.constant 0 : index
    %c0_28 = arith.constant 0 : index
    %c0_29 = arith.constant 0 : index
    %34 = vector.load %arg10[%c0_27, %c0_28, %c0_29] : memref<4x8x8xf32, #tpu.memory_space<vmem>>, vector<4x8x8xf32>
    tpu.vector_store %arg10[%c0_27, %c0_28, %c0_29], %20 {strides = array<i32>} : memref<4x8x8xf32, #tpu.memory_space<vmem>>, vector<4x8x8xf32>,
    return
  }
  func.func @transform_0(%arg0: i32) -> (i32, i32, i32) {
    %c0_i32 = arith.constant 0 : i32
    %c0_i32_0 = arith.constant 0 : i32
    %c0_i32_1 = arith.constant 0 : i32
    return %arg0, %c0_i32, %c0_i32_0 : i32, i32, i32
  }
  func.func @transform_1(%arg0: i32) -> (i32, i32, i32) {
    %c0_i32 = arith.constant 0 : i32
    %c0_i32_0 = arith.constant 0 : i32
    %c0_i32_1 = arith.constant 0 : i32
    return %arg0, %c0_i32, %c0_i32_0 : i32, i32, i32
  }
  func.func @transform_2(%arg0: i32) -> (i32, i32, i32) {
    %c0_i32 = arith.constant 0 : i32
    %c0_i32_0 = arith.constant 0 : i32
    %c0_i32_1 = arith.constant 0 : i32
    return %arg0, %c0_i32, %c0_i32_0 : i32, i32, i32
  }
  func.func @transform_3(%arg0: i32) -> (i32, i32) {
    %c0_i32 = arith.constant 0 : i32
    %c0_i32_0 = arith.constant 0 : i32
    %c0_i32_1 = arith.constant 0 : i32
    return %c0_i32, %c0_i32_0 : i32, i32
  }
  func.func @transform_4(%arg0: i32) -> (i32, i32) {
    %c0_i32 = arith.constant 0 : i32
    %c0_i32_0 = arith.constant 0 : i32
    %c0_i32_1 = arith.constant 0 : i32
    return %c0_i32, %c0_i32_0 : i32, i32
  }
  func.func @transform_5(%arg0: i32) -> (i32, i32) {
    %c0_i32 = arith.constant 0 : i32
    %c0_i32_0 = arith.constant 0 : i32
    %c0_i32_1 = arith.constant 0 : i32
    return %c0_i32, %c0_i32_0 : i32, i32
  }
  func.func @transform_6(%arg0: i32) -> (i32, i32) {
    %c0_i32 = arith.constant 0 : i32
    %c0_i32_0 = arith.constant 0 : i32
    %c0_i32_1 = arith.constant 0 : i32
    return %c0_i32, %c0_i32_0 : i32, i32
  }
  func.func @transform_7(%arg0: i32) -> (i32, i32) {
    %c0_i32 = arith.constant 0 : i32
    %c0_i32_0 = arith.constant 0 : i32
    %c0_i32_1 = arith.constant 0 : i32
    return %c0_i32, %c0_i32_0 : i32, i32
  }
  func.func @transform_8(%arg0: i32) -> (i32, i32, i32) {
    %c0_i32 = arith.constant 0 : i32
    %c0_i32_0 = arith.constant 0 : i32
    %c0_i32_1 = arith.constant 0 : i32
    return %arg0, %c0_i32, %c0_i32_0 : i32, i32, i32
  }
  func.func @transform_9(%arg0: i32) -> (i32, i32, i32) {
    %c0_i32 = arith.constant 0 : i32
    %c0_i32_0 = arith.constant 0 : i32
    %c0_i32_1 = arith.constant 0 : i32
    return %arg0, %c0_i32, %c0_i32_0 : i32, i32, i32
  }
}

</mosaic_0001>

<llo_original>
// kernel: tpu_custom_call.1
$region0: #{tpu_custom_call.1}
  #allocation0 [shape = 'u32[]', space=smem, size = 0x4, offset = 0x4, fixed_abs, tag = 'smem constant byte address 0x4 - core index']
  #allocation1 [shape = 'u32[144,128]{1,0:T(1,128)}', space=vmem, size = 0x12000, scoped, tag = 'internal scratch']
  %s0 = inlined_call_operand.hbm [shape: f32[8,8,32], index: 0, kind: input, shape index: {}]
  %s1 = inlined_call_operand.hbm [shape: f32[8,8,32], index: 1, kind: input, shape index: {}]
  %s2 = inlined_call_operand.hbm [shape: f32[8,8,32], index: 2, kind: input, shape index: {}]
  %s3 = inlined_call_operand.hbm [shape: f32[32,32], index: 3, kind: input, shape index: {}]
  %s4 = inlined_call_operand.vmem [shape: f32[1,32], index: 4, kind: input, shape index: {}]
  %s5 = inlined_call_operand.hbm [shape: f32[32,32], index: 5, kind: input, shape index: {}]
  %s6 = inlined_call_operand.hbm [shape: f32[32,32], index: 6, kind: input, shape index: {}]
  %s7 = inlined_call_operand.vmem [shape: f32[1,32], index: 7, kind: input, shape index: {}]
  %s8 = inlined_call_operand.hbm [shape: f32[8,8,32], index: 8, kind: output, shape index: {0}]
  %s9 = inlined_call_operand.hbm [shape: f32[8,8,8], index: 9, kind: output, shape index: {1}]
  %10 = xla_tuple %s8, %s9
  %s11 = sld [smem:[#allocation0]]
  $region97: #{tpu_custom_call.1} parent=0
    _
  %s13 = ssub.s32 1, %s11
  %s14 = scalar_select 0, %s13, %s11
  $region1: #{tpu_custom_call.1} parent=0
    #allocation2 [shape = 'u8[32768]{0}', space=vmem, size = 0x8000, scoped, tag = 'input window, operand 0']
    #allocation3 [shape = 's32[2]{0}', space=sflag, size = 0x8, scoped, tag = 'scoped memory for tpu_custom_call.1']
    #allocation4 [shape = 's32[2]{0}', space=sflag, size = 0x8, scoped, tag = 'scoped memory for tpu_custom_call.1']
    #allocation5 [shape = 'u8[32768]{0}', space=vmem, size = 0x8000, scoped, tag = 'input window, operand 1']
    #allocation6 [shape = 's32[2]{0}', space=sflag, size = 0x8, scoped, tag = 'scoped memory for tpu_custom_call.1']
    #allocation7 [shape = 'u8[32768]{0}', space=vmem, size = 0x8000, scoped, tag = 'input window, operand 2']
    #allocation8 [shape = 'u8[16384]{0}', space=vmem, size = 0x4000, scoped, tag = 'input window, operand 3, single buffered']
    #allocation9 [shape = 's32[1]{0}', space=sflag, size = 0x4, scoped, tag = 'scoped memory for tpu_custom_call.1']
    #allocation10 [shape = 'u8[16384]{0}', space=vmem, size = 0x4000, scoped, tag = 'input window, operand 5, single buffered']
    #allocation11 [shape = 'u8[16384]{0}', space=vmem, size = 0x4000, scoped, tag = 'input window, operand 6, single buffered']
    #allocation12 [shape = 's32[1]{0}', space=sflag, size = 0x4, scoped, tag = 'scoped memory for tpu_custom_call.1']
    #allocation13 [shape = 'u8[32768]{0}', space=vmem, size = 0x8000, scoped, tag = 'output window, operand 0']
    #allocation14 [shape = 'u8[32768]{0}', space=vmem, size = 0x8000, scoped, tag = 'output window, operand 1']
    #allocation15 [shape = 's32[2]{0}', space=sflag, size = 0x8, scoped, tag = 'scoped memory for tpu_custom_call.1']
    %15 = vsyncpa [#allocation3], 0
    %s16 = scalar_lea.sflag [#allocation3], 1
    %17 = vsyncpa %s16, 0
    %18 = vsyncpa [#allocation6], 0
    %s19 = scalar_lea.sflag [#allocation6], 1
    %20 = vsyncpa %s19, 0
    %21 = vsyncpa [#allocation9], 0
    %22 = vsyncpa [#allocation12], 0
    %23 = vsyncpa [#allocation4], 0
    %s24 = scalar_lea.sflag [#allocation4], 1
    %25 = vsyncpa %s24, 0
    %26 = vsyncpa [#allocation15], 0
    %s27 = scalar_lea.sflag [#allocation15], 1
    %28 = vsyncpa %s27, 0
    loop: start=0, step=1, limit=4
    $region2: #{tpu_custom_call.1} parent=1 // loop_pre_header
      _
    $region3: #{tpu_custom_call.1} parent=1 // loop_header
      %s30 = sphi 0, %s34
      %p31 = scmp.ge.s32.totalorder %s30, 4
      %s40 = sphi 0, %s42
      %s43 = sphi 0, %s40
      %s44 = sphi 0, %s43
      %s60 = sphi 0, %s44
      %s66 = sphi 0, %s68
      %s69 = sphi 0, %s66
      %s70 = sphi 0, %s69
      %s86 = sphi 0, %s70
      %s92 = sphi 0, %s94
      %s95 = sphi 0, %s92
      %s96 = sphi 0, %s95
      %s112 = sphi 0, %s96
      %s116 = sphi 0, %s116
      %s118 = sphi 0, %s116
      %s119 = sphi 0, %s118
      %s133 = sphi 0, %s119
      %s137 = sphi 0, %s137
      %s139 = sphi 0, %s137
      %s140 = sphi 0, %s139
      %s154 = sphi 0, %s140
      %s158 = sphi 0, %s158
      %s160 = sphi 0, %s158
      %s161 = sphi 0, %s160
      %s175 = sphi 0, %s161
      %s179 = sphi 0, %s179
      %s181 = sphi 0, %s179
      %s182 = sphi 0, %s181
      %s196 = sphi 0, %s182
      %s200 = sphi 0, %s200
      %s202 = sphi 0, %s200
      %s203 = sphi 0, %s202
      %s217 = sphi 0, %s203
      %s223 = sphi 0, %s225
      %s226 = sphi 0, %s223
      %s227 = sphi 0, %s226
      %s243 = sphi 0, %s227
      %s249 = sphi 0, %s251
      %s252 = sphi 0, %s249
      %s253 = sphi 0, %s252
      %s269 = sphi 0, %s253
    $region4: #{tpu_custom_call.1} parent=1 // loop_header_branch
      %33 = sbr.rel (%p31) target = $region8
    $region5: #{tpu_custom_call.1} parent=1 // loop_body
      %s35 = ssub.s32 %s30, 1
      %s36 = ssub.s32 %s30, 2
      %s37 = sadd.s32 %s30, 1
      %s38 = ssub.s32 %s30, %s37
      %p39 = scmp.eq.s32.totalorder %s38, 0
      %s41 = sadd.s32 %s40, 1
      %s42 = scalar_select %p39, %s40, %s41
      %p45 = pneg %p39
      %p46 = scmp.eq.s32.totalorder %s30, 1
      %p47 = por %p45, %p46
      %p48 = scmp.ne.s32.totalorder %s40, %s43
      %p49 = scmp.eq.s32.totalorder %s30, 0
      %p50 = por %p48, %p49
      %p51 = scmp.ne.s32.totalorder %s40, %s43
      %p52 = scmp.eq.s32.totalorder %s35, 1
      %p53 = por %p51, %p52
      %p54 = scmp.ne.s32.totalorder %s43, %s44
      %p55 = scmp.eq.s32.totalorder %s35, 0
      %p56 = por %p54, %p55
      %p57 = scmp.ne.s32.totalorder %s43, %s44
      %p58 = scmp.eq.s32.totalorder %s36, 1
      %p59 = por %p57, %p58
      %p61 = scmp.ne.s32.totalorder %s44, %s60
      %p62 = scmp.eq.s32.totalorder %s36, 0
      %p63 = por %p61, %p62
      %s64 = ssub.s32 %s30, %s37
      %p65 = scmp.eq.s32.totalorder %s64, 0
      %s67 = sadd.s32 %s66, 1
      %s68 = scalar_select %p65, %s66, %s67
      %p71 = pneg %p65
      %p72 = scmp.eq.s32.totalorder %s30, 1
      %p73 = por %p71, %p72
      %p74 = scmp.ne.s32.totalorder %s66, %s69
      %p75 = scmp.eq.s32.totalorder %s30, 0
      %p76 = por %p74, %p75
      %p77 = scmp.ne.s32.totalorder %s66, %s69
      %p78 = scmp.eq.s32.totalorder %s35, 1
      %p79 = por %p77, %p78
      %p80 = scmp.ne.s32.totalorder %s69, %s70
      %p81 = scmp.eq.s32.totalorder %s35, 0
      %p82 = por %p80, %p81
      %p83 = scmp.ne.s32.totalorder %s69, %s70
      %p84 = scmp.eq.s32.totalorder %s36, 1
      %p85 = por %p83, %p84
      %p87 = scmp.ne.s32.totalorder %s70, %s86
      %p88 = scmp.eq.s32.totalorder %s36, 0
      %p89 = por %p87, %p88
      %s90 = ssub.s32 %s30, %s37
      %p91 = scmp.eq.s32.totalorder %s90, 0
      %s93 = sadd.s32 %s92, 1
      %s94 = scalar_select %p91, %s92, %s93
      %p97 = pneg %p91
      %p98 = scmp.eq.s32.totalorder %s30, 1
      %p99 = por %p97, %p98
      %p100 = scmp.ne.s32.totalorder %s92, %s95
      %p101 = scmp.eq.s32.totalorder %s30, 0
      %p102 = por %p100, %p101
      %p103 = scmp.ne.s32.totalorder %s92, %s95
      %p104 = scmp.eq.s32.totalorder %s35, 1
      %p105 = por %p103, %p104
      %p106 = scmp.ne.s32.totalorder %s95, %s96
      %p107 = scmp.eq.s32.totalorder %s35, 0
      %p108 = por %p106, %p107
      %p109 = scmp.ne.s32.totalorder %s95, %s96
      %p110 = scmp.eq.s32.totalorder %s36, 1
      %p111 = por %p109, %p110
      %p113 = scmp.ne.s32.totalorder %s96, %s112
      %p114 = scmp.eq.s32.totalorder %s36, 0
      %p115 = por %p113, %p114
      %s117 = sadd.s32 %s116, 1
      %p120 = scmp.eq.s32.totalorder %s30, 1
      %p121 = scmp.ne.s32.totalorder %s116, %s118
      %p122 = scmp.eq.s32.totalorder %s30, 0
      %p123 = por %p121, %p122
      %p124 = scmp.ne.s32.totalorder %s116, %s118
      %p125 = scmp.eq.s32.totalorder %s35, 1
      %p126 = por %p124, %p125
      %p127 = scmp.ne.s32.totalorder %s118, %s119
      %p128 = scmp.eq.s32.totalorder %s35, 0
      %p129 = por %p127, %p128
      %p130 = scmp.ne.s32.totalorder %s118, %s119
      %p131 = scmp.eq.s32.totalorder %s36, 1
      %p132 = por %p130, %p131
      %p134 = scmp.ne.s32.totalorder %s119, %s133
      %p135 = scmp.eq.s32.totalorder %s36, 0
      %p136 = por %p134, %p135
      %s138 = sadd.s32 %s137, 1
      %p141 = scmp.eq.s32.totalorder %s30, 1
      %p142 = scmp.ne.s32.totalorder %s137, %s139
      %p143 = scmp.eq.s32.totalorder %s30, 0
      %p144 = por %p142, %p143
      %p145 = scmp.ne.s32.totalorder %s137, %s139
      %p146 = scmp.eq.s32.totalorder %s35, 1
      %p147 = por %p145, %p146
      %p148 = scmp.ne.s32.totalorder %s139, %s140
      %p149 = scmp.eq.s32.totalorder %s35, 0
      %p150 = por %p148, %p149
      %p151 = scmp.ne.s32.totalorder %s139, %s140
      %p152 = scmp.eq.s32.totalorder %s36, 1
      %p153 = por %p151, %p152
      %p155 = scmp.ne.s32.totalorder %s140, %s154
      %p156 = scmp.eq.s32.totalorder %s36, 0
      %p157 = por %p155, %p156
      %s159 = sadd.s32 %s158, 1
      %p162 = scmp.eq.s32.totalorder %s30, 1
      %p163 = scmp.ne.s32.totalorder %s158, %s160
      %p164 = scmp.eq.s32.totalorder %s30, 0
      %p165 = por %p163, %p164
      %p166 = scmp.ne.s32.totalorder %s158, %s160
      %p167 = scmp.eq.s32.totalorder %s35, 1
      %p168 = por %p166, %p167
      %p169 = scmp.ne.s32.totalorder %s160, %s161
      %p170 = scmp.eq.s32.totalorder %s35, 0
      %p171 = por %p169, %p170
      %p172 = scmp.ne.s32.totalorder %s160, %s161
      %p173 = scmp.eq.s32.totalorder %s36, 1
      %p174 = por %p172, %p173
      %p176 = scmp.ne.s32.totalorder %s161, %s175
      %p177 = scmp.eq.s32.totalorder %s36, 0
      %p178 = por %p176, %p177
      %s180 = sadd.s32 %s179, 1
      %p183 = scmp.eq.s32.totalorder %s30, 1
      %p184 = scmp.ne.s32.totalorder %s179, %s181
      %p185 = scmp.eq.s32.totalorder %s30, 0
      %p186 = por %p184, %p185
      %p187 = scmp.ne.s32.totalorder %s179, %s181
      %p188 = scmp.eq.s32.totalorder %s35, 1
      %p189 = por %p187, %p188
      %p190 = scmp.ne.s32.totalorder %s181, %s182
      %p191 = scmp.eq.s32.totalorder %s35, 0
      %p192 = por %p190, %p191
      %p193 = scmp.ne.s32.totalorder %s181, %s182
      %p194 = scmp.eq.s32.totalorder %s36, 1
      %p195 = por %p193, %p194
      %p197 = scmp.ne.s32.totalorder %s182, %s196
      %p198 = scmp.eq.s32.totalorder %s36, 0
      %p199 = por %p197, %p198
      %s201 = sadd.s32 %s200, 1
      %p204 = scmp.eq.s32.totalorder %s30, 1
      %p205 = scmp.ne.s32.totalorder %s200, %s202
      %p206 = scmp.eq.s32.totalorder %s30, 0
      %p207 = por %p205, %p206
      %p208 = scmp.ne.s32.totalorder %s200, %s202
      %p209 = scmp.eq.s32.totalorder %s35, 1
      %p210 = por %p208, %p209
      %p211 = scmp.ne.s32.totalorder %s202, %s203
      %p212 = scmp.eq.s32.totalorder %s35, 0
      %p213 = por %p211, %p212
      %p214 = scmp.ne.s32.totalorder %s202, %s203
      %p215 = scmp.eq.s32.totalorder %s36, 1
      %p216 = por %p214, %p215
      %p218 = scmp.ne.s32.totalorder %s203, %s217
      %p219 = scmp.eq.s32.totalorder %s36, 0
      %p220 = por %p218, %p219
      %s221 = ssub.s32 %s30, %s37
      %p222 = scmp.eq.s32.totalorder %s221, 0
      %s224 = sadd.s32 %s223, 1
      %s225 = scalar_select %p222, %s223, %s224
      %p228 = pneg %p222
      %p229 = scmp.eq.s32.totalorder %s30, 1
      %p230 = por %p228, %p229
      %p231 = scmp.ne.s32.totalorder %s223, %s226
      %p232 = scmp.eq.s32.totalorder %s30, 0
      %p233 = por %p231, %p232
      %p234 = scmp.ne.s32.totalorder %s223, %s226
      %p235 = scmp.eq.s32.totalorder %s35, 1
      %p236 = por %p234, %p235
      %p237 = scmp.ne.s32.totalorder %s226, %s227
      %p238 = scmp.eq.s32.totalorder %s35, 0
      %p239 = por %p237, %p238
      %p240 = scmp.ne.s32.totalorder %s226, %s227
      %p241 = scmp.eq.s32.totalorder %s36, 1
      %p242 = por %p240, %p241
      %p244 = scmp.ne.s32.totalorder %s227, %s243
      %p245 = scmp.eq.s32.totalorder %s36, 0
      %p246 = por %p244, %p245
      %s247 = ssub.s32 %s30, %s37
      %p248 = scmp.eq.s32.totalorder %s247, 0
      %s250 = sadd.s32 %s249, 1
      %s251 = scalar_select %p248, %s249, %s250
      %p254 = pneg %p248
      %p255 = scmp.eq.s32.totalorder %s30, 1
      %p256 = por %p254, %p255
      %p257 = scmp.ne.s32.totalorder %s249, %s252
      %p258 = scmp.eq.s32.totalorder %s30, 0
      %p259 = por %p257, %p258
      %p260 = scmp.ne.s32.totalorder %s249, %s252
      %p261 = scmp.eq.s32.totalorder %s35, 1
      %p262 = por %p260, %p261
      %p263 = scmp.ne.s32.totalorder %s252, %s253
      %p264 = scmp.eq.s32.totalorder %s35, 0
      %p265 = por %p263, %p264
      %p266 = scmp.ne.s32.totalorder %s252, %s253
      %p267 = scmp.eq.s32.totalorder %s36, 1
      %p268 = por %p266, %p267
      %p270 = scmp.ne.s32.totalorder %s253, %s269
      %p271 = scmp.eq.s32.totalorder %s36, 0
      %p272 = por %p270, %p271
      %p273 = scmp.le.s32.totalorder 1, %s30
      %p274 = scmp.lt.s32.totalorder %s30, 3
      %p275 = pnand %p273, %p274
      %p276 = pneg %p275
      // Predicated region
      $region9: #{tpu_custom_call.1} parent=5 // pred_check
        _
      $region10: #{tpu_custom_call.1} parent=5 // pred_check_branch
        %278 = sbr.rel (%p275) target = $region12
      $region11: #{tpu_custom_call.1} parent=5 // pred_region
        %s279 = ssub.s32 %s30, 1
        // Predicated region
        $region13: #{tpu_custom_call.1} parent=11 // pred_check
          %p280 = pneg %p129
        $region14: #{tpu_custom_call.1} parent=11 // pred_check_branch
          %282 = sbr.rel (%p280) target = $region16
        $region15: #{tpu_custom_call.1} parent=11 // pred_region
          %s284 = ssub.s32 512, 512
          %285 = vsyncadd [#allocation9], %s284
          %s286 = sshll.u32 [#allocation8], 4
          %s287 = int_to_ptr.vmem [resolvable:$true] %s286
          %292 = dma.hbm_to_vmem [thread:$0]  %s3, 512, %s287, [#allocation9], 128, 128, 8
        $region16: #{tpu_custom_call.1} parent=11 // pred_fallthru
          _
        // Predicated region
        $region17: #{tpu_custom_call.1} parent=11 // pred_check
          %p293 = pneg %p150
        $region18: #{tpu_custom_call.1} parent=11 // pred_check_branch
          %295 = sbr.rel (%p293) target = $region20
        $region19: #{tpu_custom_call.1} parent=11 // pred_region
          _
        $region20: #{tpu_custom_call.1} parent=11 // pred_fallthru
          _
        // Predicated region
        $region21: #{tpu_custom_call.1} parent=11 // pred_check
          %p296 = pneg %p171
        $region22: #{tpu_custom_call.1} parent=11 // pred_check_branch
          %298 = sbr.rel (%p296) target = $region24
        $region23: #{tpu_custom_call.1} parent=11 // pred_region
          %s300 = ssub.s32 512, 512
          %301 = vsyncadd [#allocation9], %s300
          %s302 = sshll.u32 [#allocation10], 4
          %s303 = int_to_ptr.vmem [resolvable:$true] %s302
          %308 = dma.hbm_to_vmem [thread:$0]  %s5, 512, %s303, [#allocation9], 128, 128, 8
        $region24: #{tpu_custom_call.1} parent=11 // pred_fallthru
          _
        // Predicated region
        $region25: #{tpu_custom_call.1} parent=11 // pred_check
          %p309 = pneg %p192
        $region26: #{tpu_custom_call.1} parent=11 // pred_check_branch
          %311 = sbr.rel (%p309) target = $region28
        $region27: #{tpu_custom_call.1} parent=11 // pred_region
          %s313 = ssub.s32 512, 512
          %314 = vsyncadd [#allocation12], %s313
          %s315 = sshll.u32 [#allocation11], 4
          %s316 = int_to_ptr.vmem [resolvable:$true] %s315
          %321 = dma.hbm_to_vmem [thread:$0]  %s6, 512, %s316, [#allocation12], 128, 128, 8
        $region28: #{tpu_custom_call.1} parent=11 // pred_fallthru
          _
        // Predicated region
        $region29: #{tpu_custom_call.1} parent=11 // pred_check
          %p322 = pneg %p213
        $region30: #{tpu_custom_call.1} parent=11 // pred_check_branch
          %324 = sbr.rel (%p322) target = $region32
        $region31: #{tpu_custom_call.1} parent=11 // pred_region
          _
        $region32: #{tpu_custom_call.1} parent=11 // pred_fallthru
          _
      $region12: #{tpu_custom_call.1} parent=5 // pred_fallthru
        _
      %p325 = scmp.lt.s32.totalorder %s30, 2
      // Predicated region
      $region33: #{tpu_custom_call.1} parent=5 // pred_check
        %p326 = pneg %p325
      $region34: #{tpu_custom_call.1} parent=5 // pred_check_branch
        %328 = sbr.rel (%p326) target = $region36
      $region35: #{tpu_custom_call.1} parent=5 // pred_region
        // Predicated region
        $region37: #{tpu_custom_call.1} parent=35 // pred_check
          %p329 = pneg %p50
        $region38: #{tpu_custom_call.1} parent=35 // pred_check_branch
          %331 = sbr.rel (%p329) target = $region40
        $region39: #{tpu_custom_call.1} parent=35 // pred_region
          %s332 = sand.u32 %s40, 1
          %s333 = scalar_lea.sflag [#allocation3], %s332
          %s334 = sand.u32 %s40, 1
          %s335 = smul.addr %s334, 32
          %s336 = scalar_lea.vmem [#allocation2], %s335
          %s337 = smul.u32 4, %s30
          %s339 = ssub.s32 512, 512
          %340 = vsyncadd %s333, %s339
          %s341 = smul.addr %s337, 128
          %s342 = scalar_lea.hbm %s0, %s341
          %s343 = sshll.u32 %s336, 4
          %s344 = int_to_ptr.vmem [resolvable:$true] %s343
          %349 = dma.hbm_to_vmem [thread:$0]  %s342, 512, %s344, %s333, 128, 128, 8
        $region40: #{tpu_custom_call.1} parent=35 // pred_fallthru
          _
        // Predicated region
        $region41: #{tpu_custom_call.1} parent=35 // pred_check
          %p350 = pneg %p76
        $region42: #{tpu_custom_call.1} parent=35 // pred_check_branch
          %352 = sbr.rel (%p350) target = $region44
        $region43: #{tpu_custom_call.1} parent=35 // pred_region
          %s353 = sand.u32 %s30, 1
          %s354 = scalar_lea.sflag [#allocation6], %s353
          %s355 = sand.u32 %s66, 1
          %s356 = smul.addr %s355, 32
          %s357 = scalar_lea.vmem [#allocation5], %s356
          %s358 = smul.u32 4, %s30
          %s360 = ssub.s32 512, 512
          %361 = vsyncadd %s354, %s360
          %s362 = smul.addr %s358, 128
          %s363 = scalar_lea.hbm %s1, %s362
          %s364 = sshll.u32 %s357, 4
          %s365 = int_to_ptr.vmem [resolvable:$true] %s364
          %370 = dma.hbm_to_vmem [thread:$0]  %s363, 512, %s365, %s354, 128, 128, 8
        $region44: #{tpu_custom_call.1} parent=35 // pred_fallthru
          _
        // Predicated region
        $region45: #{tpu_custom_call.1} parent=35 // pred_check
          %p371 = pneg %p102
        $region46: #{tpu_custom_call.1} parent=35 // pred_check_branch
          %373 = sbr.rel (%p371) target = $region48
        $region47: #{tpu_custom_call.1} parent=35 // pred_region
          %s374 = sand.u32 %s30, 1
          %s375 = scalar_lea.sflag [#allocation6], %s374
          %s376 = sand.u32 %s92, 1
          %s377 = smul.addr %s376, 32
          %s378 = scalar_lea.vmem [#allocation7], %s377
          %s379 = smul.u32 4, %s30
          %s381 = ssub.s32 512, 512
          %382 = vsyncadd %s375, %s381
          %s383 = smul.addr %s379, 128
          %s384 = scalar_lea.hbm %s2, %s383
          %s385 = sshll.u32 %s378, 4
          %s386 = int_to_ptr.vmem [resolvable:$true] %s385
          %391 = dma.hbm_to_vmem [thread:$0]  %s384, 512, %s386, %s375, 128, 128, 8
        $region48: #{tpu_custom_call.1} parent=35 // pred_fallthru
          _
      $region36: #{tpu_custom_call.1} parent=5 // pred_fallthru
        _
      %p392 = scmp.le.s32.totalorder 1, %s30
      %p393 = scmp.lt.s32.totalorder %s30, 3
      %p394 = pnand %p392, %p393
      %p395 = pneg %p394
      // Predicated region
      $region49: #{tpu_custom_call.1} parent=5 // pred_check
        _
      $region50: #{tpu_custom_call.1} parent=5 // pred_check_branch
        %397 = sbr.rel (%p394) target = $region52
      $region51: #{tpu_custom_call.1} parent=5 // pred_region
        %s398 = ssub.s32 %s30, 1
        %s399 = sand.u32 %s43, 1
        %s400 = scalar_lea.sflag [#allocation3], %s399
        %s401 = sand.u32 %s43, 1
        %s402 = smul.addr %s401, 32
        %s403 = scalar_lea.vmem [#allocation2], %s402
        // Predicated region
        $region53: #{tpu_custom_call.1} parent=51 // pred_check
          %p404 = pneg %p56
        $region54: #{tpu_custom_call.1} parent=51 // pred_check_branch
          %406 = sbr.rel (%p404) target = $region56
        $region55: #{tpu_custom_call.1} parent=51 // pred_region
          %407 = dma.done %s400, 512
        $region56: #{tpu_custom_call.1} parent=51 // pred_fallthru
          _
        %s408 = sand.u32 %s35, 1
        %s409 = scalar_lea.sflag [#allocation6], %s408
        %s410 = sand.u32 %s69, 1
        %s411 = smul.addr %s410, 32
        %s412 = scalar_lea.vmem [#allocation5], %s411
        // Predicated region
        $region57: #{tpu_custom_call.1} parent=51 // pred_check
          %p413 = pneg %p82
        $region58: #{tpu_custom_call.1} parent=51 // pred_check_branch
          %415 = sbr.rel (%p413) target = $region60
        $region59: #{tpu_custom_call.1} parent=51 // pred_region
          %416 = dma.done %s409, 512
        $region60: #{tpu_custom_call.1} parent=51 // pred_fallthru
          _
        %s417 = sand.u32 %s35, 1
        %s418 = scalar_lea.sflag [#allocation6], %s417
        %s419 = sand.u32 %s95, 1
        %s420 = smul.addr %s419, 32
        %s421 = scalar_lea.vmem [#allocation7], %s420
        // Predicated region
        $region61: #{tpu_custom_call.1} parent=51 // pred_check
          %p422 = pneg %p108
        $region62: #{tpu_custom_call.1} parent=51 // pred_check_branch
          %424 = sbr.rel (%p422) target = $region64
        $region63: #{tpu_custom_call.1} parent=51 // pred_region
          %425 = dma.done %s418, 512
        $region64: #{tpu_custom_call.1} parent=51 // pred_fallthru
          _
        // Predicated region
        $region65: #{tpu_custom_call.1} parent=51 // pred_check
          %p426 = pneg %p129
        $region66: #{tpu_custom_call.1} parent=51 // pred_check_branch
          %428 = sbr.rel (%p426) target = $region68
        $region67: #{tpu_custom_call.1} parent=51 // pred_region
          %429 = dma.done [#allocation9], 512
        $region68: #{tpu_custom_call.1} parent=51 // pred_fallthru
          _
        // Predicated region
        $region69: #{tpu_custom_call.1} parent=51 // pred_check
          %p430 = pneg %p171
        $region70: #{tpu_custom_call.1} parent=51 // pred_check_branch
          %432 = sbr.rel (%p430) target = $region72
        $region71: #{tpu_custom_call.1} parent=51 // pred_region
          %433 = dma.done [#allocation9], 512
        $region72: #{tpu_custom_call.1} parent=51 // pred_fallthru
          _
        // Predicated region
        $region73: #{tpu_custom_call.1} parent=51 // pred_check
          %p434 = pneg %p192
        $region74: #{tpu_custom_call.1} parent=51 // pred_check_branch
          %436 = sbr.rel (%p434) target = $region76
        $region75: #{tpu_custom_call.1} parent=51 // pred_region
          %437 = dma.done [#allocation12], 512
        $region76: #{tpu_custom_call.1} parent=51 // pred_fallthru
          _
        %s438 = sand.u32 %s43, 1
        %s439 = scalar_lea.sflag [#allocation3], %s438
        %s440 = sand.u32 %s43, 1
        %s441 = smul.addr %s440, 32
        %s442 = scalar_lea.vmem [#allocation2], %s441
        %p443 = pneg %p56
        %p444 = pneg %p53
        %s445 = sand.u32 %s35, 1
        %s446 = scalar_lea.sflag [#allocation6], %s445
        %s447 = sand.u32 %s69, 1
        %s448 = smul.addr %s447, 32
        %s449 = scalar_lea.vmem [#allocation5], %s448
        %p450 = pneg %p82
        %p451 = pneg %p79
        %s452 = sand.u32 %s35, 1
        %s453 = scalar_lea.sflag [#allocation6], %s452
        %s454 = sand.u32 %s95, 1
        %s455 = smul.addr %s454, 32
        %s456 = scalar_lea.vmem [#allocation7], %s455
        %p457 = pneg %p108
        %p458 = pneg %p105
        %p459 = pneg %p129
        %p460 = pneg %p126
        %p461 = pneg %p150
        %p462 = pneg %p147
        %p463 = pneg %p171
        %p464 = pneg %p168
        %p465 = pneg %p192
        %p466 = pneg %p189
        %p467 = pneg %p213
        %p468 = pneg %p210
        %p469 = pneg %p239
        %p470 = pneg %p236
        %s471 = sand.u32 %s226, 1
        %s472 = scalar_lea.sflag [#allocation4], %s471
        %s473 = sand.u32 %s226, 1
        %s474 = smul.addr %s473, 32
        %s475 = scalar_lea.vmem [#allocation13], %s474
        %p476 = pneg %p265
        %p477 = pneg %p262
        %s478 = sand.u32 %s252, 1
        %s479 = scalar_lea.sflag [#allocation15], %s478
        %s480 = sand.u32 %s252, 1
        %s481 = smul.addr %s480, 32
        %s482 = scalar_lea.vmem [#allocation14], %s481
        %s483 = smul.u32 4, %s35
        %s484 = smul.u32 4, %s35
        %s485 = smul.u32 4, %s35
        %s486 = smul.u32 4, %s35
        %s487 = smul.u32 4, %s35
        %v488 = vld [vmem:[%s421] sm:$0xff]
        %v489 = vld [vmem:[%s421 + $0x8] sm:$0xff]
        %v490 = vld [vmem:[%s421 + $0x10] sm:$0xff]
        %v491 = vld [vmem:[%s421 + $0x18] sm:$0xff]
        %v492 = vld [vmem:[%s403] sm:$0xff]
        %v493 = vld [vmem:[%s403 + $0x8] sm:$0xff]
        %v494 = vld [vmem:[%s403 + $0x10] sm:$0xff]
        %v495 = vld [vmem:[%s403 + $0x18] sm:$0xff]
        %v496 = vld [vmem:[%s412] sm:$0xff]
        %v497 = vld [vmem:[%s412 + $0x8] sm:$0xff]
        %v498 = vld [vmem:[%s412 + $0x10] sm:$0xff]
        %v499 = vld [vmem:[%s412 + $0x18] sm:$0xff]
        %v500 = vld [vmem:[#allocation8] sm:$0xff]
        %v501 = vld [vmem:[#allocation8 + $0x8] sm:$0xff]
        %v502 = vld [vmem:[#allocation8 + $0x10] sm:$0xff]
        %v503 = vld [vmem:[#allocation8 + $0x18] sm:$0xff]
        %v504 = vld [vmem:[%s4] sm:$0x1]
        %v506 = vlaneseq
        %v507 = vshrl.u32 %v506, 7
        %v508 = vsub.s32 0, %v507
        %v509 = vrot.slane %v504, %v508
        %vm511 = vcmask 261120
        %v513 = vsel %vm511, %v488, 0
        %v516 = vsel %vm511, %v489, 0
        %v519 = vsel %vm511, %v490, 0
        %v522 = vsel %vm511, %v491, 0
        %524 = vmatprep.subr.mxu0 0.0
        %525 = vmatpush1.msra.mxu0 %v500
        %526 = vmatprep.subr.mxu0 0.0
        %527 = vmatpush1.msra.mxu0 %v501
        %528 = vmatprep.subr.mxu0 0.0
        %529 = vmatpush1.msra.mxu0 %v502
        %530 = vmatprep.subr.mxu0 0.0
        %531 = vmatpush1.msra.mxu0 %v503
        %532 = vmatprep.subr.mxu0 0.0
        %533 = vmatpush1.msra.mxu0 0.0
        %534 = vmatprep.subr.mxu0 0.0
        %535 = vmatpush1.msra.mxu0 0.0
        %536 = vmatprep.subr.mxu0 0.0
        %537 = vmatpush1.msra.mxu0 0.0
        %538 = vmatprep.subr.mxu0 0.0
        %539 = vmatpush1.msra.mxu0 0.0
        %540 = vmatprep.subr.mxu0 0.0
        %541 = vmatpush1.msra.mxu0 0.0
        %542 = vmatprep.subr.mxu0 0.0
        %543 = vmatpush1.msra.mxu0 0.0
        %544 = vmatprep.subr.mxu0 0.0
        %545 = vmatpush1.msra.mxu0 0.0
        %546 = vmatprep.subr.mxu0 0.0
        %547 = vmatpush1.msra.mxu0 0.0
        %548 = vmatprep.subr.mxu0 0.0
        %549 = vmatpush1.msra.mxu0 0.0
        %550 = vmatprep.subr.mxu0 0.0
        %551 = vmatpush1.msra.mxu0 0.0
        %552 = vmatprep.subr.mxu0 0.0
        %553 = vmatpush1.msra.mxu0 0.0
        %554 = vmatprep.subr.mxu0 0.0
        %555 = vmatpush1.msra.mxu0 0.0
        %556 = vmatprep.subr.mxu0 0.0
        %557 = vmatpush1.msra.mxu0 0.0
        %558 = vmatprep.subr.mxu0 0.0
        %559 = vmatpush1.msra.mxu0 0.0
        %560 = vmatprep.subr.mxu0 0.0
        %561 = vmatpush1.msra.mxu0 0.0
        %562 = vmatprep.subr.mxu0 0.0
        %563 = vmatpush1.msra.mxu0 0.0
        %564 = vmatprep.subr.mxu0 0.0
        %565 = vmatpush1.msra.mxu0 0.0
        %566 = vmatprep.subr.mxu0 0.0
        %567 = vmatpush1.msra.mxu0 0.0
        %568 = vmatprep.subr.mxu0 0.0
        %569 = vmatpush1.msra.mxu0 0.0
        %570 = vmatprep.subr.mxu0 0.0
        %571 = vmatpush1.msra.mxu0 0.0
        %572 = vmatprep.subr.mxu0 0.0
        %573 = vmatpush1.msra.mxu0 0.0
        %574 = vmatprep.subr.mxu0 0.0
        %575 = vmatpush1.msra.mxu0 0.0
        %576 = vmatprep.subr.mxu0 0.0
        %577 = vmatpush1.msra.mxu0 0.0
        %578 = vmatprep.subr.mxu0 0.0
        %579 = vmatpush1.msra.mxu0 0.0
        %580 = vmatprep.subr.mxu0 0.0
        %581 = vmatpush1.msra.mxu0 0.0
        %582 = vmatprep.subr.mxu0 0.0
        %583 = vmatpush1.msra.mxu0 0.0
        %584 = vmatprep.subr.mxu0 0.0
        %585 = vmatpush1.msra.mxu0 0.0
        %586 = vmatprep.subr.mxu0 0.0
        %587 = vmatpush1.msra.mxu0 0.0
        %588 = vmatprep.mubr.f32.mxu0 0.0
        %589 = vmatmul.mubr.f32.gmra.mrb[0].mxu0 %v513
        %v590 = vpop.f32.mrb[0].mxu0
        %v591 = vadd.f32 %v509, %v590
        %v592 = vpop.f32.mrb[0].mxu0
        %593 = vmatprep.mubr.f32.mxu0 0.0
        %594 = vmatmul.mubr.f32.gmra.mrb[0].mxu0 %v516
        %v595 = vpop.f32.mrb[0].mxu0
        %v596 = vadd.f32 %v509, %v595
        %v597 = vpop.f32.mrb[0].mxu0
        %598 = vmatprep.mubr.f32.mxu0 0.0
        %599 = vmatmul.mubr.f32.gmra.mrb[0].mxu0 %v519
        %v600 = vpop.f32.mrb[0].mxu0
        %v601 = vadd.f32 %v509, %v600
        %v602 = vpop.f32.mrb[0].mxu0
        %603 = vmatprep.mubr.f32.mxu0 0.0
        %604 = vmatmul.mubr.f32.gmra.mrb[0].mxu0 %v522
        %v605 = vpop.f32.mrb[0].mxu0
        %v606 = vadd.f32 %v509, %v605
        %v607 = vpop.f32.mrb[0].mxu0
        %608 = vdwg.mxu0
        %v610 = vsel %vm511, %v591, 0
        %v613 = vsel %vm511, %v492, 0
        %615 = vmatprep.subr.mxu0 0.0
        %616 = vmatpush1.xpose.msra.mxu0 %v613
        %617 = vmatprep.subr.mxu0 0.0
        %618 = vmatpush1.xpose.msra.mxu0 0.0
        %619 = vmatprep.subr.mxu0 0.0
        %620 = vmatpush1.xpose.msra.mxu0 0.0
        %621 = vmatprep.subr.mxu0 0.0
        %622 = vmatpush1.xpose.msra.mxu0 0.0
        %623 = vmatprep.subr.mxu0 0.0
        %624 = vmatpush1.xpose.msra.mxu0 0.0
        %625 = vmatprep.subr.mxu0 0.0
        %626 = vmatpush1.xpose.msra.mxu0 0.0
        %627 = vmatprep.subr.mxu0 0.0
        %628 = vmatpush1.xpose.msra.mxu0 0.0
        %629 = vmatprep.subr.mxu0 0.0
        %630 = vmatpush1.xpose.msra.mxu0 0.0
        %631 = vmatprep.subr.mxu0 0.0
        %632 = vmatpush1.xpose.msra.mxu0 0.0
        %633 = vmatprep.subr.mxu0 0.0
        %634 = vmatpush1.xpose.msra.mxu0 0.0
        %635 = vmatprep.subr.mxu0 0.0
        %636 = vmatpush1.xpose.msra.mxu0 0.0
        %637 = vmatprep.subr.mxu0 0.0
        %638 = vmatpush1.xpose.msra.mxu0 0.0
        %639 = vmatprep.subr.mxu0 0.0
        %640 = vmatpush1.xpose.msra.mxu0 0.0
        %641 = vmatprep.subr.mxu0 0.0
        %642 = vmatpush1.xpose.msra.mxu0 0.0
        %643 = vmatprep.subr.mxu0 0.0
        %644 = vmatpush1.xpose.msra.mxu0 0.0
        %645 = vmatprep.subr.mxu0 0.0
        %646 = vmatpush1.xpose.msra.mxu0 0.0
        %647 = vmatprep.subr.mxu0 0.0
        %648 = vmatpush1.xpose.msra.mxu0 0.0
        %649 = vmatprep.subr.mxu0 0.0
        %650 = vmatpush1.xpose.msra.mxu0 0.0
        %651 = vmatprep.subr.mxu0 0.0
        %652 = vmatpush1.xpose.msra.mxu0 0.0
        %653 = vmatprep.subr.mxu0 0.0
        %654 = vmatpush1.xpose.msra.mxu0 0.0
        %655 = vmatprep.subr.mxu0 0.0
        %656 = vmatpush1.xpose.msra.mxu0 0.0
        %657 = vmatprep.subr.mxu0 0.0
        %658 = vmatpush1.xpose.msra.mxu0 0.0
        %659 = vmatprep.subr.mxu0 0.0
        %660 = vmatpush1.xpose.msra.mxu0 0.0
        %661 = vmatprep.subr.mxu0 0.0
        %662 = vmatpush1.xpose.msra.mxu0 0.0
        %663 = vmatprep.subr.mxu0 0.0
        %664 = vmatpush1.xpose.msra.mxu0 0.0
        %665 = vmatprep.subr.mxu0 0.0
        %666 = vmatpush1.xpose.msra.mxu0 0.0
        %667 = vmatprep.subr.mxu0 0.0
        %668 = vmatpush1.xpose.msra.mxu0 0.0
        %669 = vmatprep.subr.mxu0 0.0
        %670 = vmatpush1.xpose.msra.mxu0 0.0
        %671 = vmatprep.subr.mxu0 0.0
        %672 = vmatpush1.xpose.msra.mxu0 0.0
        %673 = vmatprep.subr.mxu0 0.0
        %674 = vmatpush1.xpose.msra.mxu0 0.0
        %675 = vmatprep.subr.mxu0 0.0
        %676 = vmatpush1.xpose.msra.mxu0 0.0
        %677 = vmatprep.subr.mxu0 0.0
        %678 = vmatpush1.xpose.msra.mxu0 0.0
        %679 = vmatprep.mubr.f32.mxu0 0.0
        %680 = vmatmul.mubr.f32.gmra.mrb[0].mxu0 %v610
        %v681 = vpop.f32.mrb[0].mxu0
        %v682 = vadd.f32 0.0, %v681
        %v683 = vpop.f32.mrb[0].mxu0
        %684 = vdwg.mxu0
        %v686 = vsel %vm511, %v596, 0
        %v689 = vsel %vm511, %v493, 0
        %691 = vmatprep.subr.mxu0 0.0
        %692 = vmatpush1.xpose.msra.mxu0 %v689
        %693 = vmatprep.subr.mxu0 0.0
        %694 = vmatpush1.xpose.msra.mxu0 0.0
        %695 = vmatprep.subr.mxu0 0.0
        %696 = vmatpush1.xpose.msra.mxu0 0.0
        %697 = vmatprep.subr.mxu0 0.0
        %698 = vmatpush1.xpose.msra.mxu0 0.0
        %699 = vmatprep.subr.mxu0 0.0
        %700 = vmatpush1.xpose.msra.mxu0 0.0
        %701 = vmatprep.subr.mxu0 0.0
        %702 = vmatpush1.xpose.msra.mxu0 0.0
        %703 = vmatprep.subr.mxu0 0.0
        %704 = vmatpush1.xpose.msra.mxu0 0.0
        %705 = vmatprep.subr.mxu0 0.0
        %706 = vmatpush1.xpose.msra.mxu0 0.0
        %707 = vmatprep.subr.mxu0 0.0
        %708 = vmatpush1.xpose.msra.mxu0 0.0
        %709 = vmatprep.subr.mxu0 0.0
        %710 = vmatpush1.xpose.msra.mxu0 0.0
        %711 = vmatprep.subr.mxu0 0.0
        %712 = vmatpush1.xpose.msra.mxu0 0.0
        %713 = vmatprep.subr.mxu0 0.0
        %714 = vmatpush1.xpose.msra.mxu0 0.0
        %715 = vmatprep.subr.mxu0 0.0
        %716 = vmatpush1.xpose.msra.mxu0 0.0
        %717 = vmatprep.subr.mxu0 0.0
        %718 = vmatpush1.xpose.msra.mxu0 0.0
        %719 = vmatprep.subr.mxu0 0.0
        %720 = vmatpush1.xpose.msra.mxu0 0.0
        %721 = vmatprep.subr.mxu0 0.0
        %722 = vmatpush1.xpose.msra.mxu0 0.0
        %723 = vmatprep.subr.mxu0 0.0
        %724 = vmatpush1.xpose.msra.mxu0 0.0
        %725 = vmatprep.subr.mxu0 0.0
        %726 = vmatpush1.xpose.msra.mxu0 0.0
        %727 = vmatprep.subr.mxu0 0.0
        %728 = vmatpush1.xpose.msra.mxu0 0.0
        %729 = vmatprep.subr.mxu0 0.0
        %730 = vmatpush1.xpose.msra.mxu0 0.0
        %731 = vmatprep.subr.mxu0 0.0
        %732 = vmatpush1.xpose.msra.mxu0 0.0
        %733 = vmatprep.subr.mxu0 0.0
        %734 = vmatpush1.xpose.msra.mxu0 0.0
        %735 = vmatprep.subr.mxu0 0.0
        %736 = vmatpush1.xpose.msra.mxu0 0.0
        %737 = vmatprep.subr.mxu0 0.0
        %738 = vmatpush1.xpose.msra.mxu0 0.0
        %739 = vmatprep.subr.mxu0 0.0
        %740 = vmatpush1.xpose.msra.mxu0 0.0
        %741 = vmatprep.subr.mxu0 0.0
        %742 = vmatpush1.xpose.msra.mxu0 0.0
        %743 = vmatprep.subr.mxu0 0.0
        %744 = vmatpush1.xpose.msra.mxu0 0.0
        %745 = vmatprep.subr.mxu0 0.0
        %746 = vmatpush1.xpose.msra.mxu0 0.0
        %747 = vmatprep.subr.mxu0 0.0
        %748 = vmatpush1.xpose.msra.mxu0 0.0
        %749 = vmatprep.subr.mxu0 0.0
        %750 = vmatpush1.xpose.msra.mxu0 0.0
        %751 = vmatprep.subr.mxu0 0.0
        %752 = vmatpush1.xpose.msra.mxu0 0.0
        %753 = vmatprep.subr.mxu0 0.0
        %754 = vmatpush1.xpose.msra.mxu0 0.0
        %755 = vmatprep.mubr.f32.mxu0 0.0
        %756 = vmatmul.mubr.f32.gmra.mrb[0].mxu0 %v686
        %v757 = vpop.f32.mrb[0].mxu0
        %v758 = vadd.f32 0.0, %v757
        %v759 = vpop.f32.mrb[0].mxu0
        %760 = vdwg.mxu0
        %v762 = vsel %vm511, %v601, 0
        %v765 = vsel %vm511, %v494, 0
        %767 = vmatprep.subr.mxu0 0.0
        %768 = vmatpush1.xpose.msra.mxu0 %v765
        %769 = vmatprep.subr.mxu0 0.0
        %770 = vmatpush1.xpose.msra.mxu0 0.0
        %771 = vmatprep.subr.mxu0 0.0
        %772 = vmatpush1.xpose.msra.mxu0 0.0
        %773 = vmatprep.subr.mxu0 0.0
        %774 = vmatpush1.xpose.msra.mxu0 0.0
        %775 = vmatprep.subr.mxu0 0.0
        %776 = vmatpush1.xpose.msra.mxu0 0.0
        %777 = vmatprep.subr.mxu0 0.0
        %778 = vmatpush1.xpose.msra.mxu0 0.0
        %779 = vmatprep.subr.mxu0 0.0
        %780 = vmatpush1.xpose.msra.mxu0 0.0
        %781 = vmatprep.subr.mxu0 0.0
        %782 = vmatpush1.xpose.msra.mxu0 0.0
        %783 = vmatprep.subr.mxu0 0.0
        %784 = vmatpush1.xpose.msra.mxu0 0.0
        %785 = vmatprep.subr.mxu0 0.0
        %786 = vmatpush1.xpose.msra.mxu0 0.0
        %787 = vmatprep.subr.mxu0 0.0
        %788 = vmatpush1.xpose.msra.mxu0 0.0
        %789 = vmatprep.subr.mxu0 0.0
        %790 = vmatpush1.xpose.msra.mxu0 0.0
        %791 = vmatprep.subr.mxu0 0.0
        %792 = vmatpush1.xpose.msra.mxu0 0.0
        %793 = vmatprep.subr.mxu0 0.0
        %794 = vmatpush1.xpose.msra.mxu0 0.0
        %795 = vmatprep.subr.mxu0 0.0
        %796 = vmatpush1.xpose.msra.mxu0 0.0
        %797 = vmatprep.subr.mxu0 0.0
        %798 = vmatpush1.xpose.msra.mxu0 0.0
        %799 = vmatprep.subr.mxu0 0.0
        %800 = vmatpush1.xpose.msra.mxu0 0.0
        %801 = vmatprep.subr.mxu0 0.0
        %802 = vmatpush1.xpose.msra.mxu0 0.0
        %803 = vmatprep.subr.mxu0 0.0
        %804 = vmatpush1.xpose.msra.mxu0 0.0
        %805 = vmatprep.subr.mxu0 0.0
        %806 = vmatpush1.xpose.msra.mxu0 0.0
        %807 = vmatprep.subr.mxu0 0.0
        %808 = vmatpush1.xpose.msra.mxu0 0.0
        %809 = vmatprep.subr.mxu0 0.0
        %810 = vmatpush1.xpose.msra.mxu0 0.0
        %811 = vmatprep.subr.mxu0 0.0
        %812 = vmatpush1.xpose.msra.mxu0 0.0
        %813 = vmatprep.subr.mxu0 0.0
        %814 = vmatpush1.xpose.msra.mxu0 0.0
        %815 = vmatprep.subr.mxu0 0.0
        %816 = vmatpush1.xpose.msra.mxu0 0.0
        %817 = vmatprep.subr.mxu0 0.0
        %818 = vmatpush1.xpose.msra.mxu0 0.0
        %819 = vmatprep.subr.mxu0 0.0
        %820 = vmatpush1.xpose.msra.mxu0 0.0
        %821 = vmatprep.subr.mxu0 0.0
        %822 = vmatpush1.xpose.msra.mxu0 0.0
        %823 = vmatprep.subr.mxu0 0.0
        %824 = vmatpush1.xpose.msra.mxu0 0.0
        %825 = vmatprep.subr.mxu0 0.0
        %826 = vmatpush1.xpose.msra.mxu0 0.0
        %827 = vmatprep.subr.mxu0 0.0
        %828 = vmatpush1.xpose.msra.mxu0 0.0
        %829 = vmatprep.subr.mxu0 0.0
        %830 = vmatpush1.xpose.msra.mxu0 0.0
        %831 = vmatprep.mubr.f32.mxu0 0.0
        %832 = vmatmul.mubr.f32.gmra.mrb[0].mxu0 %v762
        %v833 = vpop.f32.mrb[0].mxu0
        %v834 = vadd.f32 0.0, %v833
        %v835 = vpop.f32.mrb[0].mxu0
        %836 = vdwg.mxu0
        %v838 = vsel %vm511, %v606, 0
        %v841 = vsel %vm511, %v495, 0
        %843 = vmatprep.subr.mxu0 0.0
        %844 = vmatpush1.xpose.msra.mxu0 %v841
        %845 = vmatprep.subr.mxu0 0.0
        %846 = vmatpush1.xpose.msra.mxu0 0.0
        %847 = vmatprep.subr.mxu0 0.0
        %848 = vmatpush1.xpose.msra.mxu0 0.0
        %849 = vmatprep.subr.mxu0 0.0
        %850 = vmatpush1.xpose.msra.mxu0 0.0
        %851 = vmatprep.subr.mxu0 0.0
        %852 = vmatpush1.xpose.msra.mxu0 0.0
        %853 = vmatprep.subr.mxu0 0.0
        %854 = vmatpush1.xpose.msra.mxu0 0.0
        %855 = vmatprep.subr.mxu0 0.0
        %856 = vmatpush1.xpose.msra.mxu0 0.0
        %857 = vmatprep.subr.mxu0 0.0
        %858 = vmatpush1.xpose.msra.mxu0 0.0
        %859 = vmatprep.subr.mxu0 0.0
        %860 = vmatpush1.xpose.msra.mxu0 0.0
        %861 = vmatprep.subr.mxu0 0.0
        %862 = vmatpush1.xpose.msra.mxu0 0.0
        %863 = vmatprep.subr.mxu0 0.0
        %864 = vmatpush1.xpose.msra.mxu0 0.0
        %865 = vmatprep.subr.mxu0 0.0
        %866 = vmatpush1.xpose.msra.mxu0 0.0
        %867 = vmatprep.subr.mxu0 0.0
        %868 = vmatpush1.xpose.msra.mxu0 0.0
        %869 = vmatprep.subr.mxu0 0.0
        %870 = vmatpush1.xpose.msra.mxu0 0.0
        %871 = vmatprep.subr.mxu0 0.0
        %872 = vmatpush1.xpose.msra.mxu0 0.0
        %873 = vmatprep.subr.mxu0 0.0
        %874 = vmatpush1.xpose.msra.mxu0 0.0
        %875 = vmatprep.subr.mxu0 0.0
        %876 = vmatpush1.xpose.msra.mxu0 0.0
        %877 = vmatprep.subr.mxu0 0.0
        %878 = vmatpush1.xpose.msra.mxu0 0.0
        %879 = vmatprep.subr.mxu0 0.0
        %880 = vmatpush1.xpose.msra.mxu0 0.0
        %881 = vmatprep.subr.mxu0 0.0
        %882 = vmatpush1.xpose.msra.mxu0 0.0
        %883 = vmatprep.subr.mxu0 0.0
        %884 = vmatpush1.xpose.msra.mxu0 0.0
        %885 = vmatprep.subr.mxu0 0.0
        %886 = vmatpush1.xpose.msra.mxu0 0.0
        %887 = vmatprep.subr.mxu0 0.0
        %888 = vmatpush1.xpose.msra.mxu0 0.0
        %889 = vmatprep.subr.mxu0 0.0
        %890 = vmatpush1.xpose.msra.mxu0 0.0
        %891 = vmatprep.subr.mxu0 0.0
        %892 = vmatpush1.xpose.msra.mxu0 0.0
        %893 = vmatprep.subr.mxu0 0.0
        %894 = vmatpush1.xpose.msra.mxu0 0.0
        %895 = vmatprep.subr.mxu0 0.0
        %896 = vmatpush1.xpose.msra.mxu0 0.0
        %897 = vmatprep.subr.mxu0 0.0
        %898 = vmatpush1.xpose.msra.mxu0 0.0
        %899 = vmatprep.subr.mxu0 0.0
        %900 = vmatpush1.xpose.msra.mxu0 0.0
        %901 = vmatprep.subr.mxu0 0.0
        %902 = vmatpush1.xpose.msra.mxu0 0.0
        %903 = vmatprep.subr.mxu0 0.0
        %904 = vmatpush1.xpose.msra.mxu0 0.0
        %905 = vmatprep.subr.mxu0 0.0
        %906 = vmatpush1.xpose.msra.mxu0 0.0
        %907 = vmatprep.mubr.f32.mxu0 0.0
        %908 = vmatmul.mubr.f32.gmra.mrb[0].mxu0 %v838
        %v909 = vpop.f32.mrb[0].mxu0
        %v910 = vadd.f32 0.0, %v909
        %v911 = vpop.f32.mrb[0].mxu0
        %912 = vdwg.mxu0
        %vm913 = vcmask 64512
        %v914 = vsel %vm913, %v682, -inf
        %915 = vmax.xlane.f32.xlu0 %v914
        %v916 = vpop.xlane.xlu0 %915
        %v917 = vsel %vm913, %v758, -inf
        %918 = vmax.xlane.f32.xlu0 %v917
        %v919 = vpop.xlane.xlu0 %918
        %v920 = vsel %vm913, %v834, -inf
        %921 = vmax.xlane.f32.xlu0 %v920
        %v922 = vpop.xlane.xlu0 %921
        %v923 = vsel %vm913, %v910, -inf
        %924 = vmax.xlane.f32.xlu0 %v923
        %v925 = vpop.xlane.xlu0 %924
        %v926 = vsub.f32 %v682, %v916
        %v927 = vsub.f32 %v758, %v919
        %v928 = vsub.f32 %v834, %v922
        %v929 = vsub.f32 %v910, %v925
        %v930 = vmul.f32 %v926, 1.442695
        %v931 = vpow.pop %v930
        %v932 = vmul.f32 %v927, 1.442695
        %v933 = vpow.pop %v932
        %v934 = vmul.f32 %v928, 1.442695
        %v935 = vpow.pop %v934
        %v936 = vmul.f32 %v929, 1.442695
        %v937 = vpow.pop %v936
        %v938 = vsel %vm913, %v931, 0.0
        %939 = vadd.xlane.f32.xlu0 %v938
        %v940 = vpop.xlane.xlu0 %939
        %v941 = vsel %vm913, %v933, 0.0
        %942 = vadd.xlane.f32.xlu0 %v941
        %v943 = vpop.xlane.xlu0 %942
        %v944 = vsel %vm913, %v935, 0.0
        %945 = vadd.xlane.f32.xlu0 %v944
        %v946 = vpop.xlane.xlu0 %945
        %v947 = vsel %vm913, %v937, 0.0
        %948 = vadd.xlane.f32.xlu0 %v947
        %v949 = vpop.xlane.xlu0 %948
        %v950 = vrcp.pop %v940
        %v951 = vrcp.pop %v943
        %v952 = vrcp.pop %v946
        %v953 = vrcp.pop %v949
        %v954 = vmul.f32 %v931, %v950
        %v955 = vmul.f32 %v933, %v951
        %v956 = vmul.f32 %v935, %v952
        %v957 = vmul.f32 %v937, %v953
        %v959 = vsel %vm913, %v954, 0
        %961 = vmatprep.subr.mxu0 0.0
        %962 = vmatpush1.msra.mxu0 %v496
        %963 = vmatprep.subr.mxu0 0.0
        %964 = vmatpush1.msra.mxu0 0.0
        %965 = vmatprep.subr.mxu0 0.0
        %966 = vmatpush1.msra.mxu0 0.0
        %967 = vmatprep.subr.mxu0 0.0
        %968 = vmatpush1.msra.mxu0 0.0
        %969 = vmatprep.subr.mxu0 0.0
        %970 = vmatpush1.msra.mxu0 0.0
        %971 = vmatprep.subr.mxu0 0.0
        %972 = vmatpush1.msra.mxu0 0.0
        %973 = vmatprep.subr.mxu0 0.0
        %974 = vmatpush1.msra.mxu0 0.0
        %975 = vmatprep.subr.mxu0 0.0
        %976 = vmatpush1.msra.mxu0 0.0
        %977 = vmatprep.subr.mxu0 0.0
        %978 = vmatpush1.msra.mxu0 0.0
        %979 = vmatprep.subr.mxu0 0.0
        %980 = vmatpush1.msra.mxu0 0.0
        %981 = vmatprep.subr.mxu0 0.0
        %982 = vmatpush1.msra.mxu0 0.0
        %983 = vmatprep.subr.mxu0 0.0
        %984 = vmatpush1.msra.mxu0 0.0
        %985 = vmatprep.subr.mxu0 0.0
        %986 = vmatpush1.msra.mxu0 0.0
        %987 = vmatprep.subr.mxu0 0.0
        %988 = vmatpush1.msra.mxu0 0.0
        %989 = vmatprep.subr.mxu0 0.0
        %990 = vmatpush1.msra.mxu0 0.0
        %991 = vmatprep.subr.mxu0 0.0
        %992 = vmatpush1.msra.mxu0 0.0
        %993 = vmatprep.subr.mxu0 0.0
        %994 = vmatpush1.msra.mxu0 0.0
        %995 = vmatprep.subr.mxu0 0.0
        %996 = vmatpush1.msra.mxu0 0.0
        %997 = vmatprep.subr.mxu0 0.0
        %998 = vmatpush1.msra.mxu0 0.0
        %999 = vmatprep.subr.mxu0 0.0
        %1000 = vmatpush1.msra.mxu0 0.0
        %1001 = vmatprep.subr.mxu0 0.0
        %1002 = vmatpush1.msra.mxu0 0.0
        %1003 = vmatprep.subr.mxu0 0.0
        %1004 = vmatpush1.msra.mxu0 0.0
        %1005 = vmatprep.subr.mxu0 0.0
        %1006 = vmatpush1.msra.mxu0 0.0
        %1007 = vmatprep.subr.mxu0 0.0
        %1008 = vmatpush1.msra.mxu0 0.0
        %1009 = vmatprep.subr.mxu0 0.0
        %1010 = vmatpush1.msra.mxu0 0.0
        %1011 = vmatprep.subr.mxu0 0.0
        %1012 = vmatpush1.msra.mxu0 0.0
        %1013 = vmatprep.subr.mxu0 0.0
        %1014 = vmatpush1.msra.mxu0 0.0
        %1015 = vmatprep.subr.mxu0 0.0
        %1016 = vmatpush1.msra.mxu0 0.0
        %1017 = vmatprep.subr.mxu0 0.0
        %1018 = vmatpush1.msra.mxu0 0.0
        %1019 = vmatprep.subr.mxu0 0.0
        %1020 = vmatpush1.msra.mxu0 0.0
        %1021 = vmatprep.subr.mxu0 0.0
        %1022 = vmatpush1.msra.mxu0 0.0
        %1023 = vmatprep.subr.mxu0 0.0
        %1024 = vmatpush1.msra.mxu0 0.0
        %1025 = vmatprep.mubr.f32.mxu0 0.0
        %1026 = vmatmul.mubr.f32.gmra.mrb[0].mxu0 %v959
        %v1027 = vpop.f32.mrb[0].mxu0
        %v1028 = vadd.f32 0.0, %v1027
        %v1029 = vpop.f32.mrb[0].mxu0
        %1030 = vdwg.mxu0
        %v1032 = vsel %vm913, %v955, 0
        %1034 = vmatprep.subr.mxu0 0.0
        %1035 = vmatpush1.msra.mxu0 %v497
        %1036 = vmatprep.subr.mxu0 0.0
        %1037 = vmatpush1.msra.mxu0 0.0
        %1038 = vmatprep.subr.mxu0 0.0
        %1039 = vmatpush1.msra.mxu0 0.0
        %1040 = vmatprep.subr.mxu0 0.0
        %1041 = vmatpush1.msra.mxu0 0.0
        %1042 = vmatprep.subr.mxu0 0.0
        %1043 = vmatpush1.msra.mxu0 0.0
        %1044 = vmatprep.subr.mxu0 0.0
        %1045 = vmatpush1.msra.mxu0 0.0
        %1046 = vmatprep.subr.mxu0 0.0
        %1047 = vmatpush1.msra.mxu0 0.0
        %1048 = vmatprep.subr.mxu0 0.0
        %1049 = vmatpush1.msra.mxu0 0.0
        %1050 = vmatprep.subr.mxu0 0.0
        %1051 = vmatpush1.msra.mxu0 0.0
        %1052 = vmatprep.subr.mxu0 0.0
        %1053 = vmatpush1.msra.mxu0 0.0
        %1054 = vmatprep.subr.mxu0 0.0
        %1055 = vmatpush1.msra.mxu0 0.0
        %1056 = vmatprep.subr.mxu0 0.0
        %1057 = vmatpush1.msra.mxu0 0.0
        %1058 = vmatprep.subr.mxu0 0.0
        %1059 = vmatpush1.msra.mxu0 0.0
        %1060 = vmatprep.subr.mxu0 0.0
        %1061 = vmatpush1.msra.mxu0 0.0
        %1062 = vmatprep.subr.mxu0 0.0
        %1063 = vmatpush1.msra.mxu0 0.0
        %1064 = vmatprep.subr.mxu0 0.0
        %1065 = vmatpush1.msra.mxu0 0.0
        %1066 = vmatprep.subr.mxu0 0.0
        %1067 = vmatpush1.msra.mxu0 0.0
        %1068 = vmatprep.subr.mxu0 0.0
        %1069 = vmatpush1.msra.mxu0 0.0
        %1070 = vmatprep.subr.mxu0 0.0
        %1071 = vmatpush1.msra.mxu0 0.0
        %1072 = vmatprep.subr.mxu0 0.0
        %1073 = vmatpush1.msra.mxu0 0.0
        %1074 = vmatprep.subr.mxu0 0.0
        %1075 = vmatpush1.msra.mxu0 0.0
        %1076 = vmatprep.subr.mxu0 0.0
        %1077 = vmatpush1.msra.mxu0 0.0
        %1078 = vmatprep.subr.mxu0 0.0
        %1079 = vmatpush1.msra.mxu0 0.0
        %1080 = vmatprep.subr.mxu0 0.0
        %1081 = vmatpush1.msra.mxu0 0.0
        %1082 = vmatprep.subr.mxu0 0.0
        %1083 = vmatpush1.msra.mxu0 0.0
        %1084 = vmatprep.subr.mxu0 0.0
        %1085 = vmatpush1.msra.mxu0 0.0
        %1086 = vmatprep.subr.mxu0 0.0
        %1087 = vmatpush1.msra.mxu0 0.0
        %1088 = vmatprep.subr.mxu0 0.0
        %1089 = vmatpush1.msra.mxu0 0.0
        %1090 = vmatprep.subr.mxu0 0.0
        %1091 = vmatpush1.msra.mxu0 0.0
        %1092 = vmatprep.subr.mxu0 0.0
        %1093 = vmatpush1.msra.mxu0 0.0
        %1094 = vmatprep.subr.mxu0 0.0
        %1095 = vmatpush1.msra.mxu0 0.0
        %1096 = vmatprep.subr.mxu0 0.0
        %1097 = vmatpush1.msra.mxu0 0.0
        %1098 = vmatprep.mubr.f32.mxu0 0.0
        %1099 = vmatmul.mubr.f32.gmra.mrb[0].mxu0 %v1032
        %v1100 = vpop.f32.mrb[0].mxu0
        %v1101 = vadd.f32 0.0, %v1100
        %v1102 = vpop.f32.mrb[0].mxu0
        %1103 = vdwg.mxu0
        %v1105 = vsel %vm913, %v956, 0
        %1107 = vmatprep.subr.mxu0 0.0
        %1108 = vmatpush1.msra.mxu0 %v498
        %1109 = vmatprep.subr.mxu0 0.0
        %1110 = vmatpush1.msra.mxu0 0.0
        %1111 = vmatprep.subr.mxu0 0.0
        %1112 = vmatpush1.msra.mxu0 0.0
        %1113 = vmatprep.subr.mxu0 0.0
        %1114 = vmatpush1.msra.mxu0 0.0
        %1115 = vmatprep.subr.mxu0 0.0
        %1116 = vmatpush1.msra.mxu0 0.0
        %1117 = vmatprep.subr.mxu0 0.0
        %1118 = vmatpush1.msra.mxu0 0.0
        %1119 = vmatprep.subr.mxu0 0.0
        %1120 = vmatpush1.msra.mxu0 0.0
        %1121 = vmatprep.subr.mxu0 0.0
        %1122 = vmatpush1.msra.mxu0 0.0
        %1123 = vmatprep.subr.mxu0 0.0
        %1124 = vmatpush1.msra.mxu0 0.0
        %1125 = vmatprep.subr.mxu0 0.0
        %1126 = vmatpush1.msra.mxu0 0.0
        %1127 = vmatprep.subr.mxu0 0.0
        %1128 = vmatpush1.msra.mxu0 0.0
        %1129 = vmatprep.subr.mxu0 0.0
        %1130 = vmatpush1.msra.mxu0 0.0
        %1131 = vmatprep.subr.mxu0 0.0
        %1132 = vmatpush1.msra.mxu0 0.0
        %1133 = vmatprep.subr.mxu0 0.0
        %1134 = vmatpush1.msra.mxu0 0.0
        %1135 = vmatprep.subr.mxu0 0.0
        %1136 = vmatpush1.msra.mxu0 0.0
        %1137 = vmatprep.subr.mxu0 0.0
        %1138 = vmatpush1.msra.mxu0 0.0
        %1139 = vmatprep.subr.mxu0 0.0
        %1140 = vmatpush1.msra.mxu0 0.0
        %1141 = vmatprep.subr.mxu0 0.0
        %1142 = vmatpush1.msra.mxu0 0.0
        %1143 = vmatprep.subr.mxu0 0.0
        %1144 = vmatpush1.msra.mxu0 0.0
        %1145 = vmatprep.subr.mxu0 0.0
        %1146 = vmatpush1.msra.mxu0 0.0
        %1147 = vmatprep.subr.mxu0 0.0
        %1148 = vmatpush1.msra.mxu0 0.0
        %1149 = vmatprep.subr.mxu0 0.0
        %1150 = vmatpush1.msra.mxu0 0.0
        %1151 = vmatprep.subr.mxu0 0.0
        %1152 = vmatpush1.msra.mxu0 0.0
        %1153 = vmatprep.subr.mxu0 0.0
        %1154 = vmatpush1.msra.mxu0 0.0
        %1155 = vmatprep.subr.mxu0 0.0
        %1156 = vmatpush1.msra.mxu0 0.0
        %1157 = vmatprep.subr.mxu0 0.0
        %1158 = vmatpush1.msra.mxu0 0.0
        %1159 = vmatprep.subr.mxu0 0.0
        %1160 = vmatpush1.msra.mxu0 0.0
        %1161 = vmatprep.subr.mxu0 0.0
        %1162 = vmatpush1.msra.mxu0 0.0
        %1163 = vmatprep.subr.mxu0 0.0
        %1164 = vmatpush1.msra.mxu0 0.0
        %1165 = vmatprep.subr.mxu0 0.0
        %1166 = vmatpush1.msra.mxu0 0.0
        %1167 = vmatprep.subr.mxu0 0.0
        %1168 = vmatpush1.msra.mxu0 0.0
        %1169 = vmatprep.subr.mxu0 0.0
        %1170 = vmatpush1.msra.mxu0 0.0
        %1171 = vmatprep.mubr.f32.mxu0 0.0
        %1172 = vmatmul.mubr.f32.gmra.mrb[0].mxu0 %v1105
        %v1173 = vpop.f32.mrb[0].mxu0
        %v1174 = vadd.f32 0.0, %v1173
        %v1175 = vpop.f32.mrb[0].mxu0
        %1176 = vdwg.mxu0
        %v1178 = vsel %vm913, %v957, 0
        %1180 = vmatprep.subr.mxu0 0.0
        %1181 = vmatpush1.msra.mxu0 %v499
        %1182 = vmatprep.subr.mxu0 0.0
        %1183 = vmatpush1.msra.mxu0 0.0
        %1184 = vmatprep.subr.mxu0 0.0
        %1185 = vmatpush1.msra.mxu0 0.0
        %1186 = vmatprep.subr.mxu0 0.0
        %1187 = vmatpush1.msra.mxu0 0.0
        %1188 = vmatprep.subr.mxu0 0.0
        %1189 = vmatpush1.msra.mxu0 0.0
        %1190 = vmatprep.subr.mxu0 0.0
        %1191 = vmatpush1.msra.mxu0 0.0
        %1192 = vmatprep.subr.mxu0 0.0
        %1193 = vmatpush1.msra.mxu0 0.0
        %1194 = vmatprep.subr.mxu0 0.0
        %1195 = vmatpush1.msra.mxu0 0.0
        %1196 = vmatprep.subr.mxu0 0.0
        %1197 = vmatpush1.msra.mxu0 0.0
        %1198 = vmatprep.subr.mxu0 0.0
        %1199 = vmatpush1.msra.mxu0 0.0
        %1200 = vmatprep.subr.mxu0 0.0
        %1201 = vmatpush1.msra.mxu0 0.0
        %1202 = vmatprep.subr.mxu0 0.0
        %1203 = vmatpush1.msra.mxu0 0.0
        %1204 = vmatprep.subr.mxu0 0.0
        %1205 = vmatpush1.msra.mxu0 0.0
        %1206 = vmatprep.subr.mxu0 0.0
        %1207 = vmatpush1.msra.mxu0 0.0
        %1208 = vmatprep.subr.mxu0 0.0
        %1209 = vmatpush1.msra.mxu0 0.0
        %1210 = vmatprep.subr.mxu0 0.0
        %1211 = vmatpush1.msra.mxu0 0.0
        %1212 = vmatprep.subr.mxu0 0.0
        %1213 = vmatpush1.msra.mxu0 0.0
        %1214 = vmatprep.subr.mxu0 0.0
        %1215 = vmatpush1.msra.mxu0 0.0
        %1216 = vmatprep.subr.mxu0 0.0
        %1217 = vmatpush1.msra.mxu0 0.0
        %1218 = vmatprep.subr.mxu0 0.0
        %1219 = vmatpush1.msra.mxu0 0.0
        %1220 = vmatprep.subr.mxu0 0.0
        %1221 = vmatpush1.msra.mxu0 0.0
        %1222 = vmatprep.subr.mxu0 0.0
        %1223 = vmatpush1.msra.mxu0 0.0
        %1224 = vmatprep.subr.mxu0 0.0
        %1225 = vmatpush1.msra.mxu0 0.0
        %1226 = vmatprep.subr.mxu0 0.0
        %1227 = vmatpush1.msra.mxu0 0.0
        %1228 = vmatprep.subr.mxu0 0.0
        %1229 = vmatpush1.msra.mxu0 0.0
        %1230 = vmatprep.subr.mxu0 0.0
        %1231 = vmatpush1.msra.mxu0 0.0
        %1232 = vmatprep.subr.mxu0 0.0
        %1233 = vmatpush1.msra.mxu0 0.0
        %1234 = vmatprep.subr.mxu0 0.0
        %1235 = vmatpush1.msra.mxu0 0.0
        %1236 = vmatprep.subr.mxu0 0.0
        %1237 = vmatpush1.msra.mxu0 0.0
        %1238 = vmatprep.subr.mxu0 0.0
        %1239 = vmatpush1.msra.mxu0 0.0
        %1240 = vmatprep.subr.mxu0 0.0
        %1241 = vmatpush1.msra.mxu0 0.0
        %1242 = vmatprep.subr.mxu0 0.0
        %1243 = vmatpush1.msra.mxu0 0.0
        %1244 = vmatprep.mubr.f32.mxu0 0.0
        %1245 = vmatmul.mubr.f32.gmra.mrb[0].mxu0 %v1178
        %v1246 = vpop.f32.mrb[0].mxu0
        %v1247 = vadd.f32 0.0, %v1246
        %v1248 = vpop.f32.mrb[0].mxu0
        %1249 = vdwg.mxu0
        %v1250 = vld [vmem:[#allocation10] sm:$0xff]
        %v1251 = vld [vmem:[#allocation10 + $0x8] sm:$0xff]
        %v1252 = vld [vmem:[#allocation10 + $0x10] sm:$0xff]
        %v1253 = vld [vmem:[#allocation10 + $0x18] sm:$0xff]
        %v1254 = vld [vmem:[#allocation11] sm:$0xff]
        %v1255 = vld [vmem:[#allocation11 + $0x8] sm:$0xff]
        %v1256 = vld [vmem:[#allocation11 + $0x10] sm:$0xff]
        %v1257 = vld [vmem:[#allocation11 + $0x18] sm:$0xff]
        %1258 = vmatprep.subr.mxu0 0.0
        %1259 = vmatpush1.msra.mxu0 %v1254
        %1260 = vmatprep.subr.mxu0 0.0
        %1261 = vmatpush1.msra.mxu0 %v1255
        %1262 = vmatprep.subr.mxu0 0.0
        %1263 = vmatpush1.msra.mxu0 %v1256
        %1264 = vmatprep.subr.mxu0 0.0
        %1265 = vmatpush1.msra.mxu0 %v1257
        %1266 = vmatprep.subr.mxu0 0.0
        %1267 = vmatpush1.msra.mxu0 0.0
        %1268 = vmatprep.subr.mxu0 0.0
        %1269 = vmatpush1.msra.mxu0 0.0
        %1270 = vmatprep.subr.mxu0 0.0
        %1271 = vmatpush1.msra.mxu0 0.0
        %1272 = vmatprep.subr.mxu0 0.0
        %1273 = vmatpush1.msra.mxu0 0.0
        %1274 = vmatprep.subr.mxu0 0.0
        %1275 = vmatpush1.msra.mxu0 0.0
        %1276 = vmatprep.subr.mxu0 0.0
        %1277 = vmatpush1.msra.mxu0 0.0
        %1278 = vmatprep.subr.mxu0 0.0
        %1279 = vmatpush1.msra.mxu0 0.0
        %1280 = vmatprep.subr.mxu0 0.0
        %1281 = vmatpush1.msra.mxu0 0.0
        %1282 = vmatprep.subr.mxu0 0.0
        %1283 = vmatpush1.msra.mxu0 0.0
        %1284 = vmatprep.subr.mxu0 0.0
        %1285 = vmatpush1.msra.mxu0 0.0
        %1286 = vmatprep.subr.mxu0 0.0
        %1287 = vmatpush1.msra.mxu0 0.0
        %1288 = vmatprep.subr.mxu0 0.0
        %1289 = vmatpush1.msra.mxu0 0.0
        %1290 = vmatprep.subr.mxu0 0.0
        %1291 = vmatpush1.msra.mxu0 0.0
        %1292 = vmatprep.subr.mxu0 0.0
        %1293 = vmatpush1.msra.mxu0 0.0
        %1294 = vmatprep.subr.mxu0 0.0
        %1295 = vmatpush1.msra.mxu0 0.0
        %1296 = vmatprep.subr.mxu0 0.0
        %1297 = vmatpush1.msra.mxu0 0.0
        %1298 = vmatprep.subr.mxu0 0.0
        %1299 = vmatpush1.msra.mxu0 0.0
        %1300 = vmatprep.subr.mxu0 0.0
        %1301 = vmatpush1.msra.mxu0 0.0
        %1302 = vmatprep.subr.mxu0 0.0
        %1303 = vmatpush1.msra.mxu0 0.0
        %1304 = vmatprep.subr.mxu0 0.0
        %1305 = vmatpush1.msra.mxu0 0.0
        %1306 = vmatprep.subr.mxu0 0.0
        %1307 = vmatpush1.msra.mxu0 0.0
        %1308 = vmatprep.subr.mxu0 0.0
        %1309 = vmatpush1.msra.mxu0 0.0
        %1310 = vmatprep.subr.mxu0 0.0
        %1311 = vmatpush1.msra.mxu0 0.0
        %1312 = vmatprep.subr.mxu0 0.0
        %1313 = vmatpush1.msra.mxu0 0.0
        %1314 = vmatprep.subr.mxu0 0.0
        %1315 = vmatpush1.msra.mxu0 0.0
        %1316 = vmatprep.subr.mxu0 0.0
        %1317 = vmatpush1.msra.mxu0 0.0
        %1318 = vmatprep.subr.mxu0 0.0
        %1319 = vmatpush1.msra.mxu0 0.0
        %1320 = vmatprep.subr.mxu0 0.0
        %1321 = vmatpush1.msra.mxu0 0.0
        %1322 = vmatprep.mubr.f32.mxu0 0.0
        %1323 = vmatmul.mubr.f32.gmra.mrb[0].mxu0 %v513
        %v1324 = vpop.f32.mrb[0].mxu0
        %v1325 = vadd.f32 0.0, %v1324
        %v1326 = vpop.f32.mrb[0].mxu0
        %1327 = vmatprep.mubr.f32.mxu0 0.0
        %1328 = vmatmul.mubr.f32.gmra.mrb[0].mxu0 %v516
        %v1329 = vpop.f32.mrb[0].mxu0
        %v1330 = vadd.f32 0.0, %v1329
        %v1331 = vpop.f32.mrb[0].mxu0
        %1332 = vmatprep.mubr.f32.mxu0 0.0
        %1333 = vmatmul.mubr.f32.gmra.mrb[0].mxu0 %v519
        %v1334 = vpop.f32.mrb[0].mxu0
        %v1335 = vadd.f32 0.0, %v1334
        %v1336 = vpop.f32.mrb[0].mxu0
        %1337 = vmatprep.mubr.f32.mxu0 0.0
        %1338 = vmatmul.mubr.f32.gmra.mrb[0].mxu0 %v522
        %v1339 = vpop.f32.mrb[0].mxu0
        %v1340 = vadd.f32 0.0, %v1339
        %v1341 = vpop.f32.mrb[0].mxu0
        %1342 = vdwg.mxu0
        %v1344 = vsel %vm511, %v1028, 0
        %v1347 = vsel %vm511, %v1101, 0
        %v1350 = vsel %vm511, %v1174, 0
        %v1353 = vsel %vm511, %v1247, 0
        %1355 = vmatprep.subr.mxu0 0.0
        %1356 = vmatpush1.msra.mxu0 %v1250
        %1357 = vmatprep.subr.mxu0 0.0
        %1358 = vmatpush1.msra.mxu0 %v1251
        %1359 = vmatprep.subr.mxu0 0.0
        %1360 = vmatpush1.msra.mxu0 %v1252
        %1361 = vmatprep.subr.mxu0 0.0
        %1362 = vmatpush1.msra.mxu0 %v1253
        %1363 = vmatprep.subr.mxu0 0.0
        %1364 = vmatpush1.msra.mxu0 0.0
        %1365 = vmatprep.subr.mxu0 0.0
        %1366 = vmatpush1.msra.mxu0 0.0
        %1367 = vmatprep.subr.mxu0 0.0
        %1368 = vmatpush1.msra.mxu0 0.0
        %1369 = vmatprep.subr.mxu0 0.0
        %1370 = vmatpush1.msra.mxu0 0.0
        %1371 = vmatprep.subr.mxu0 0.0
        %1372 = vmatpush1.msra.mxu0 0.0
        %1373 = vmatprep.subr.mxu0 0.0
        %1374 = vmatpush1.msra.mxu0 0.0
        %1375 = vmatprep.subr.mxu0 0.0
        %1376 = vmatpush1.msra.mxu0 0.0
        %1377 = vmatprep.subr.mxu0 0.0
        %1378 = vmatpush1.msra.mxu0 0.0
        %1379 = vmatprep.subr.mxu0 0.0
        %1380 = vmatpush1.msra.mxu0 0.0
        %1381 = vmatprep.subr.mxu0 0.0
        %1382 = vmatpush1.msra.mxu0 0.0
        %1383 = vmatprep.subr.mxu0 0.0
        %1384 = vmatpush1.msra.mxu0 0.0
        %1385 = vmatprep.subr.mxu0 0.0
        %1386 = vmatpush1.msra.mxu0 0.0
        %1387 = vmatprep.subr.mxu0 0.0
        %1388 = vmatpush1.msra.mxu0 0.0
        %1389 = vmatprep.subr.mxu0 0.0
        %1390 = vmatpush1.msra.mxu0 0.0
        %1391 = vmatprep.subr.mxu0 0.0
        %1392 = vmatpush1.msra.mxu0 0.0
        %1393 = vmatprep.subr.mxu0 0.0
        %1394 = vmatpush1.msra.mxu0 0.0
        %1395 = vmatprep.subr.mxu0 0.0
        %1396 = vmatpush1.msra.mxu0 0.0
        %1397 = vmatprep.subr.mxu0 0.0
        %1398 = vmatpush1.msra.mxu0 0.0
        %1399 = vmatprep.subr.mxu0 0.0
        %1400 = vmatpush1.msra.mxu0 0.0
        %1401 = vmatprep.subr.mxu0 0.0
        %1402 = vmatpush1.msra.mxu0 0.0
        %1403 = vmatprep.subr.mxu0 0.0
        %1404 = vmatpush1.msra.mxu0 0.0
        %1405 = vmatprep.subr.mxu0 0.0
        %1406 = vmatpush1.msra.mxu0 0.0
        %1407 = vmatprep.subr.mxu0 0.0
        %1408 = vmatpush1.msra.mxu0 0.0
        %1409 = vmatprep.subr.mxu0 0.0
        %1410 = vmatpush1.msra.mxu0 0.0
        %1411 = vmatprep.subr.mxu0 0.0
        %1412 = vmatpush1.msra.mxu0 0.0
        %1413 = vmatprep.subr.mxu0 0.0
        %1414 = vmatpush1.msra.mxu0 0.0
        %1415 = vmatprep.subr.mxu0 0.0
        %1416 = vmatpush1.msra.mxu0 0.0
        %1417 = vmatprep.subr.mxu0 0.0
        %1418 = vmatpush1.msra.mxu0 0.0
        %1419 = vmatprep.mubr.f32.mxu0 0.0
        %1420 = vmatmul.mubr.f32.gmra.mrb[0].mxu0 %v1344
        %v1421 = vpop.f32.mrb[0].mxu0
        %v1422 = vadd.f32 %v1325, %v1421
        %v1423 = vpop.f32.mrb[0].mxu0
        %1424 = vmatprep.mubr.f32.mxu0 0.0
        %1425 = vmatmul.mubr.f32.gmra.mrb[0].mxu0 %v1347
        %v1426 = vpop.f32.mrb[0].mxu0
        %v1427 = vadd.f32 %v1330, %v1426
        %v1428 = vpop.f32.mrb[0].mxu0
        %1429 = vmatprep.mubr.f32.mxu0 0.0
        %1430 = vmatmul.mubr.f32.gmra.mrb[0].mxu0 %v1350
        %v1431 = vpop.f32.mrb[0].mxu0
        %v1432 = vadd.f32 %v1335, %v1431
        %v1433 = vpop.f32.mrb[0].mxu0
        %1434 = vmatprep.mubr.f32.mxu0 0.0
        %1435 = vmatmul.mubr.f32.gmra.mrb[0].mxu0 %v1353
        %v1436 = vpop.f32.mrb[0].mxu0
        %v1437 = vadd.f32 %v1340, %v1436
        %v1438 = vpop.f32.mrb[0].mxu0
        %1439 = vdwg.mxu0
        %v1440 = vld [vmem:[%s7] sm:$0x1]
        %v1442 = vlaneseq
        %v1443 = vshrl.u32 %v1442, 7
        %v1444 = vsub.s32 0, %v1443
        %v1445 = vrot.slane %v1440, %v1444
        %v1447 = vadd.f32 %v1422, %v1445
        %v1448 = vadd.f32 %v1427, %v1445
        %v1449 = vadd.f32 %v1432, %v1445
        %v1450 = vadd.f32 %v1437, %v1445
        %v1451 = vtanh.pop %v1447
        %v1452 = vtanh.pop %v1448
        %v1453 = vtanh.pop %v1449
        %v1454 = vtanh.pop %v1450
        %1455 = vst.msk [vmem:[%s475] sm:$0xff] %vm511, %v1451
        %1456 = vst.msk [vmem:[%s475 + $0x8] sm:$0xff] %vm511, %v1452
        %1457 = vst.msk [vmem:[%s475 + $0x10] sm:$0xff] %vm511, %v1453
        %1458 = vst.msk [vmem:[%s475 + $0x18] sm:$0xff] %vm511, %v1454
        %1459 = vst.msk [vmem:[%s482] sm:$0xff] %vm913, %v954
        %1460 = vst.msk [vmem:[%s482 + $0x8] sm:$0xff] %vm913, %v955
        %1461 = vst.msk [vmem:[%s482 + $0x10] sm:$0xff] %vm913, %v956
        %1462 = vst.msk [vmem:[%s482 + $0x18] sm:$0xff] %vm913, %v957
        %s1463 = sand.u32 %s226, 1
        %s1464 = scalar_lea.sflag [#allocation4], %s1463
        %s1465 = sand.u32 %s226, 1
        %s1466 = smul.addr %s1465, 32
        %s1467 = scalar_lea.vmem [#allocation13], %s1466
        %s1468 = sand.u32 %s252, 1
        %s1469 = scalar_lea.sflag [#allocation15], %s1468
        %s1470 = sand.u32 %s252, 1
        %s1471 = smul.addr %s1470, 32
        %s1472 = scalar_lea.vmem [#allocation14], %s1471
        // Predicated region
        $region77: #{tpu_custom_call.1} parent=51 // pred_check
          %p1473 = pneg %p236
        $region78: #{tpu_custom_call.1} parent=51 // pred_check_branch
          %1475 = sbr.rel (%p1473) target = $region80
        $region79: #{tpu_custom_call.1} parent=51 // pred_region
          %s1476 = smul.u32 4, %s35
          %s1478 = ssub.s32 512, 512
          %1479 = vsyncadd %s1464, %s1478
          %s1480 = smul.addr %s1476, 128
          %s1481 = scalar_lea.hbm %s8, %s1480
          %s1482 = sshll.u32 %s1467, 4
          %s1483 = int_to_ptr.vmem [resolvable:$true] %s1482
          %1488 = dma.vmem_to_hbm [thread:$0]  %s1483, 512, %s1481, %s1464, 128, 128, 8
        $region80: #{tpu_custom_call.1} parent=51 // pred_fallthru
          _
        // Predicated region
        $region81: #{tpu_custom_call.1} parent=51 // pred_check
          %p1489 = pneg %p262
        $region82: #{tpu_custom_call.1} parent=51 // pred_check_branch
          %1491 = sbr.rel (%p1489) target = $region84
        $region83: #{tpu_custom_call.1} parent=51 // pred_region
          %s1492 = smul.u32 4, %s35
          %s1494 = ssub.s32 512, 512
          %1495 = vsyncadd %s1469, %s1494
          %s1496 = smul.addr %s1492, 128
          %s1497 = scalar_lea.hbm %s9, %s1496
          %s1498 = sshll.u32 %s1472, 4
          %s1499 = int_to_ptr.vmem [resolvable:$true] %s1498
          %1504 = dma.vmem_to_hbm [thread:$0]  %s1499, 512, %s1497, %s1469, 128, 128, 8
        $region84: #{tpu_custom_call.1} parent=51 // pred_fallthru
          _
      $region52: #{tpu_custom_call.1} parent=5 // pred_fallthru
        _
      %p1505 = scmp.le.s32.totalorder 2, %s30
      // Predicated region
      $region85: #{tpu_custom_call.1} parent=5 // pred_check
        %p1506 = pneg %p1505
      $region86: #{tpu_custom_call.1} parent=5 // pred_check_branch
        %1508 = sbr.rel (%p1506) target = $region88
      $region87: #{tpu_custom_call.1} parent=5 // pred_region
        %s1509 = ssub.s32 %s30, 2
        // Predicated region
        $region89: #{tpu_custom_call.1} parent=87 // pred_check
          %p1510 = pneg %p242
        $region90: #{tpu_custom_call.1} parent=87 // pred_check_branch
          %1512 = sbr.rel (%p1510) target = $region92
        $region91: #{tpu_custom_call.1} parent=87 // pred_region
          %s1513 = sand.u32 %s227, 1
          %s1514 = scalar_lea.sflag [#allocation4], %s1513
          %s1515 = sand.u32 %s227, 1
          %s1516 = smul.addr %s1515, 32
          %s1517 = scalar_lea.vmem [#allocation13], %s1516
          %1518 = dma.done %s1514, 512
        $region92: #{tpu_custom_call.1} parent=87 // pred_fallthru
          _
        // Predicated region
        $region93: #{tpu_custom_call.1} parent=87 // pred_check
          %p1519 = pneg %p268
        $region94: #{tpu_custom_call.1} parent=87 // pred_check_branch
          %1521 = sbr.rel (%p1519) target = $region96
        $region95: #{tpu_custom_call.1} parent=87 // pred_region
          %s1522 = sand.u32 %s253, 1
          %s1523 = scalar_lea.sflag [#allocation15], %s1522
          %s1524 = sand.u32 %s253, 1
          %s1525 = smul.addr %s1524, 32
          %s1526 = scalar_lea.vmem [#allocation14], %s1525
          %1527 = dma.done %s1523, 512
        $region96: #{tpu_custom_call.1} parent=87 // pred_fallthru
          _
      $region88: #{tpu_custom_call.1} parent=5 // pred_fallthru
        _
    $region6: #{tpu_custom_call.1} parent=1 // loop_footer
      %s34 = sadd.s32 1, %s30
    $region7: #{tpu_custom_call.1} parent=1 // loop_footer_branch
      %29 = sbr.rel target = $region3
    $region8: #{tpu_custom_call.1} parent=1 // loop_exit
      _
    %1528 = vsyncpa [#allocation3], 1
    %s1529 = scalar_lea.sflag [#allocation3], 1
    %1530 = vsyncpa %s1529, 1
    %1531 = vsyncpa [#allocation6], 1
    %s1532 = scalar_lea.sflag [#allocation6], 1
    %1533 = vsyncpa %s1532, 1
    %1534 = vsyncpa [#allocation9], 1
    %1535 = vsyncpa [#allocation12], 1
    %1536 = vsyncpa [#allocation4], 1
    %s1537 = scalar_lea.sflag [#allocation4], 1
    %1538 = vsyncpa %s1537, 1
    %1539 = vsyncpa [#allocation15], 1
    %s1540 = scalar_lea.sflag [#allocation15], 1
    %1541 = vsyncpa %s1540, 1

</llo_original>
